<compile_context>
chip_gen: v7x
topology: tpu7x:2x2x1
jax: 0.10.0
libtpu: 0.0.40
codegen_flags: <defaults>
</compile_context>

<pallas_src>
import functools

import jax
import jax.numpy as jnp
from jax import lax
from jax.experimental import pallas as pl
from jax.experimental.pallas import tpu as pltpu


def _round_up(n, m):
    return ((n + m - 1) // m) * m


def _chip_kind():
    try:
        return jax.devices()[0].device_kind.lower()
    except Exception:
        return ""


def _cross_attention_kernel(scale2, mul_dtype,
                            x_ref, y_ref, wq_ref, wkv_ref, wp_ref,
                            bp_ref, seg_ref, hbias_ref, o_ref):
    x = x_ref[...]                                    # (TB, DP)   bf16
    y = y_ref[...]                                    # (TB, DP)   bf16
    dp = x.shape[-1]

    # q projection and fused k|v projection on the MXU, f32 accumulation.
    q = jnp.dot(x, wq_ref[...], preferred_element_type=jnp.float32)    # (TB, DP)   f32
    kv = jnp.dot(y, wkv_ref[...], preferred_element_type=jnp.float32)  # (TB, 2*DP) f32
    k = kv[:, :dp]                                    # 128-aligned column split
    v = kv[:, dp:]

    # dots[b, h] = scale^2 * sum_{d in head h} q[b,d] * k[b,d]
    # S is UNSCALED bf16 (one-hot per column of head membership); scale^2 is a
    # single f32 scalar VPU multiply after the MXU dot.
    qk = (q * k).astype(seg_ref.dtype)                                  # bf16
    dots = jnp.dot(qk, seg_ref[...], preferred_element_type=jnp.float32)  # (TB, HP)
    # Padded head lanes get -1e30 (real dots never approach that magnitude, so
    # a padded lane can never win the row max / softmax).
    dots = dots * scale2 + hbias_ref[...]

    # softmax over the lane-dense, padded head axis.
    m = jnp.max(dots, axis=-1, keepdims=True)
    e = jnp.exp(dots - m)
    # approx=True -> EUP vrcp, ~1e-3 rel error; use approx=False if the
    # consumer needs tighter accuracy (still EUP-resident).
    attn = e * pl.reciprocal(jnp.sum(e, axis=-1, keepdims=True), approx=True)  # (TB, HP)

    # out[b, h*hd + d] = attn[b, h] * v[b, h*hd + d]
    # Broadcast attn back over head segments with a transposed-B dot against the
    # SAME bf16 S operand (no separate S^T in VMEM).
    attn_full = lax.dot_general(
        attn.astype(seg_ref.dtype), seg_ref[...],
        dimension_numbers=(((1,), (1,)), ((), ())),
        preferred_element_type=jnp.float32)           # (TB, DP) f32

    # Elementwise attn*v: bf16 on v6e/v7x (bf16 VALU), f32 on v5e; always feed
    # the MXU in bf16.
    out = (attn_full.astype(mul_dtype) * v.astype(mul_dtype)).astype(wp_ref.dtype)

    # output projection (with bias, f32 accumulation).
    proj = jnp.dot(out, wp_ref[...], preferred_element_type=jnp.float32) + bp_ref[...]
    o_ref[...] = proj.astype(o_ref.dtype)


def prepare_cross_attention1_params(params, *, dim, num_heads,
                                    compute_dtype=jnp.bfloat16):
    """Init-time (NOT per-call) parameter prep: transpose once, split & repack
    Wkv at a 128-aligned boundary, zero-pad the feature axis to a multiple of
    128 (lane-dense), cast to bf16, build the unscaled segment matrix."""
    assert dim % num_heads == 0
    head_dim = dim // num_heads
    scale = head_dim ** (-0.5)
    dp = _round_up(dim, 128)                     # lane-dense feature axis
    hp = _round_up(max(num_heads, 1), 128)       # lane-dense head axis

    def pad2(a, rows, cols):
        return jnp.pad(a, ((0, rows - a.shape[0]), (0, cols - a.shape[1])))

    wq_t = pad2(params["wq"].T, dp, dp).astype(compute_dtype)             # (DP, DP)
    wkv_t = params["wkv"].T                                               # (dim, 2*dim)
    wk_t = pad2(wkv_t[:, :dim], dp, dp)
    wv_t = pad2(wkv_t[:, dim:], dp, dp)
    wkv_packed = jnp.concatenate([wk_t, wv_t], axis=1).astype(compute_dtype)  # (DP, 2*DP)
    wp_t = pad2(params["wp"].T, dp, dp).astype(compute_dtype)             # (DP, DP)
    bp = jnp.pad(params["bp"].reshape(1, dim),
                 ((0, 0), (0, dp - dim))).astype(jnp.float32)             # (1, DP)

    d_idx = jnp.arange(dp)
    h_idx = jnp.arange(hp)
    seg = ((d_idx[:, None] // head_dim) == h_idx[None, :]) & (d_idx[:, None] < dim)
    seg = seg.astype(compute_dtype)                                       # (DP, HP) UNSCALED bf16
    head_bias = jnp.where(h_idx < num_heads, 0.0, -1e30)
    head_bias = head_bias.astype(jnp.float32).reshape(1, hp)              # (1, HP)

    return {
        "wq": wq_t, "wkv": wkv_packed, "wp": wp_t, "bp": bp,
        "seg": seg, "head_bias": head_bias,
        "scale2": float(scale * scale),
        "dim": dim, "dim_padded": dp, "heads_padded": hp,
        "num_heads": num_heads, "compute_dtype": compute_dtype,
    }


def cross_attention1(x, y, mask, prepared, *, batch_tile=None, out_dtype=None):
    """Pallas implementation of CrossAttention1.forward (eval mode, dropout p=0)."""
    del mask  # unused by the reference attn_mask, kept for signature fidelity
    B, dim = x.shape
    assert dim == prepared["dim"]
    cdt = prepared["compute_dtype"]
    dp = prepared["dim_padded"]
    hp = prepared["heads_padded"]
    out_dtype = out_dtype or x.dtype

    kind = _chip_kind()
    is_v5 = "v5" in kind
    is_v7 = "v7" in kind

    # Batch tile: 128 on v5e (M=256 gains nothing on its 4x128 MXU), 256 on
    # v6e/v7x.  On v7x make sure the "parallel" batch axis has >=2 grid steps
    # so both TensorCores get work.
    if batch_tile is None:
        batch_tile = 128 if is_v5 else 256
    min_steps = 2 if (is_v7 and B > 8) else 1
    tb = max(8, min(batch_tile, _round_up(pl.cdiv(B, min_steps), 8)))
    b_pad = _round_up(B, tb)
    grid = (b_pad // tb,)

    # Zero-pad activations (feature axis to DP, batch to the tile) so every
    # tile is lane-dense and padded rows are well-defined zeros (no Inf/NaN
    # through exp/softmax).
    x_c = x.astype(cdt)
    y_c = y.astype(cdt)
    pad_rows = b_pad - B
    pad_cols = dp - dim
    if pad_rows or pad_cols:
        x_c = jnp.pad(x_c, ((0, pad_rows), (0, pad_cols)))
        y_c = jnp.pad(y_c, ((0, pad_rows), (0, pad_cols)))

    # VMEM budget from actual bytes, ceiling from the chip's real capacity.
    try:
        vmem_cap = int(pltpu.get_tpu_info().vmem_capacity_bytes)
    except Exception:
        vmem_cap = 64 << 20  # conservative (v7x per-TC) fallback
    act_bytes = 2 * 2 * tb * dp * jnp.dtype(cdt).itemsize          # x, y double-buffered
    out_bytes = 2 * tb * dp * jnp.dtype(out_dtype).itemsize        # out double-buffered
    const_keys = ("wq", "wkv", "wp", "bp", "seg", "head_bias")
    wt_bytes = sum(int(prepared[k].size) * prepared[k].dtype.itemsize for k in const_keys)
    scratch_bytes = 12 * tb * max(2 * dp, hp) * 4                  # f32 intermediates headroom
    vmem_ceiling = max(32 << 20, vmem_cap - (16 << 20))

    mul_dtype = jnp.float32 if is_v5 else jnp.bfloat16
    kernel = functools.partial(_cross_attention_kernel, prepared["scale2"], mul_dtype)
    row_spec = pl.BlockSpec((tb, dp), lambda i: (i, 0))

    def _call(single_buffer_consts):
        if single_buffer_consts:
            # Grid-invariant operands: stay VMEM-resident, no double-buffer.
            const = lambda shape: pl.BlockSpec(shape, lambda i: (0, 0),
                                               pipeline_mode=pl.Buffered(1))
            wt_factor = 1
        else:
            const = lambda shape: pl.BlockSpec(shape, lambda i: (0, 0))
            wt_factor = 2
        vmem_limit = int(min(vmem_ceiling,
                             max(32 << 20,
                                 act_bytes + out_bytes + wt_factor * wt_bytes
                                 + scratch_bytes + (4 << 20))))
        return pl.pallas_call(
            kernel,
            out_shape=jax.ShapeDtypeStruct((b_pad, dp), out_dtype),
            grid=grid,
            in_specs=[
                row_spec,                 # x
                row_spec,                 # y
                const((dp, dp)),          # Wq^T            (bf16)
                const((dp, 2 * dp)),      # [Wk^T | Wv^T]   (bf16, 128-aligned split)
                const((dp, dp)),          # Wp^T            (bf16)
                const((1, dp)),           # proj bias       (f32)
                const((dp, hp)),          # segment matrix S (unscaled bf16)
                const((1, hp)),           # head-padding bias (f32)
            ],
            out_specs=row_spec,
            compiler_params=pltpu.CompilerParams(
                dimension_semantics=("parallel",),   # megacore sharding on v7x
                vmem_limit_bytes=vmem_limit),
        )(x_c, y_c, prepared["wq"], prepared["wkv"], prepared["wp"],
          prepared["bp"], prepared["seg"], prepared["head_bias"])

    try:
        out = _call(True)
    except Exception:
        # Fallback for JAX versions that reject pipeline_mode=pl.Buffered(1).
        out = _call(False)

    if b_pad != B or dp != dim:
        out = out[:B, :dim]
    return out


def cross_attention1_reference(x, y, mask, params, *, num_heads):
    """Pure-JAX f32 reference mirroring the PyTorch forward exactly."""
    del mask
    B, dim = x.shape
    head_dim = dim // num_heads
    scale = head_dim ** (-0.5)

    q = x @ params["wq"].T                               # (B, dim), no bias
    kv = y @ params["wkv"].T                             # (B, 2*dim), no bias
    k, v = kv[:, :dim], kv[:, dim:]

    q = q.reshape(B, num_heads, head_dim)
    k = k.reshape(B, num_heads, head_dim)
    v = v.reshape(B, num_heads, head_dim)

    q = q * scale                                        # q *= scale
    dots = jnp.einsum("bhd,bhd->bh", q, k) * scale       # * self.scale
    attn = jax.nn.softmax(dots, axis=-1)                 # softmax over heads
    out = jnp.einsum("bh,bhd->bhd", attn, v)
    out = out.reshape(B, dim)
    return out @ params["wp"].T + params["bp"]


if __name__ == "__main__":
    B, dim, num_heads = 8, 64, 8

    key = jax.random.PRNGKey(0)
    kx, ky, kq, kkv, kp, kb = jax.random.split(key, 6)

    x = jax.random.normal(kx, (B, dim), dtype=jnp.float32)
    y = jax.random.normal(ky, (B, dim), dtype=jnp.float32)
    mask = jnp.ones((B, num_heads), dtype=jnp.float32)   # unused, as in the reference

    params = {
        "wq": jax.random.normal(kq, (dim, dim), dtype=jnp.float32) * 0.05,
        "wkv": jax.random.normal(kkv, (2 * dim, dim), dtype=jnp.float32) * 0.05,
        "wp": jax.random.normal(kp, (dim, dim), dtype=jnp.float32) * 0.05,
        "bp": jax.random.normal(kb, (dim,), dtype=jnp.float32) * 0.05,
    }

    # One-time parameter prep (transpose / split / pad / bf16 cast) — outside the hot path.
    prepared = prepare_cross_attention1_params(
        params, dim=dim, num_heads=num_heads, compute_dtype=jnp.bfloat16)

    out = cross_attention1(x, y, mask, prepared)
    out = jax.block_until_ready(out)

    ref = cross_attention1_reference(x, y, mask, params, num_heads=num_heads)
    assert out.shape == (B, dim)
    # bf16 weights/activations (f32 accumulation) vs an all-f32 reference.
    assert jnp.allclose(out, ref, atol=2e-2, rtol=2e-2), "Pallas kernel mismatch vs reference"

    print("KERNEL_OK")
</pallas_src>

<mosaic_0001>
module attributes {stable_mosaic.version = 11 : i64} {
  func.func @_cross_attention_kernel(%arg0: i32, %arg1: memref<8x128xbf16, #tpu.memory_space<vmem>>, %arg2: memref<8x128xbf16, #tpu.memory_space<vmem>>, %arg3: memref<128x128xbf16, #tpu.memory_space<vmem>>, %arg4: memref<128x256xbf16, #tpu.memory_space<vmem>>, %arg5: memref<128x128xbf16, #tpu.memory_space<vmem>>, %arg6: memref<1x128xf32, #tpu.memory_space<vmem>>, %arg7: memref<128x128xbf16, #tpu.memory_space<vmem>>, %arg8: memref<1x128xf32, #tpu.memory_space<vmem>>, %arg9: memref<8x128xf32, #tpu.memory_space<vmem>>) attributes {dimension_semantics = [#tpu.dimension_semantics<parallel>], iteration_bounds = array<i64: 1>, scalar_prefetch = 0 : i64, scratch_operands = 0 : i64, tpu.core_type = #tpu.core_type<tc>, window_params = [{transform_indices = @transform_0, window_bounds = array<i64: 8, 128>}, {transform_indices = @transform_1, window_bounds = array<i64: 8, 128>}, {pipeline_mode = #tpu.pipeline_mode<synchronous>, transform_indices = @transform_2, window_bounds = array<i64: 128, 128>}, {pipeline_mode = #tpu.pipeline_mode<synchronous>, transform_indices = @transform_3, window_bounds = array<i64: 128, 256>}, {pipeline_mode = #tpu.pipeline_mode<synchronous>, transform_indices = @transform_4, window_bounds = array<i64: 128, 128>}, {pipeline_mode = #tpu.pipeline_mode<synchronous>, transform_indices = @transform_5, window_bounds = array<i64: 1, 128>}, {pipeline_mode = #tpu.pipeline_mode<synchronous>, transform_indices = @transform_6, window_bounds = array<i64: 128, 128>}, {pipeline_mode = #tpu.pipeline_mode<synchronous>, transform_indices = @transform_7, window_bounds = array<i64: 1, 128>}, {transform_indices = @transform_8, window_bounds = array<i64: 8, 128>}]} {
    %c0 = arith.constant 0 : index
    %c0_0 = arith.constant 0 : index
    %0 = vector.load %arg1[%c0, %c0_0] : memref<8x128xbf16, #tpu.memory_space<vmem>>, vector<8x128xbf16>
    %c0_1 = arith.constant 0 : index
    %c0_2 = arith.constant 0 : index
    %1 = vector.load %arg2[%c0_1, %c0_2] : memref<8x128xbf16, #tpu.memory_space<vmem>>, vector<8x128xbf16>
    %c0_3 = arith.constant 0 : index
    %c0_4 = arith.constant 0 : index
    %2 = vector.load %arg3[%c0_3, %c0_4] : memref<128x128xbf16, #tpu.memory_space<vmem>>, vector<128x128xbf16>
    %cst = arith.constant dense<0.000000e+00> : vector<8x128xf32>
    %3 = tpu.matmul %0, %2, %cst {dimension_numbers = #tpu.dot_dimension_numbers<[1], [0], [0], [1], [0, 0, 1, 1], [], []>} : vector<8x128xbf16>, vector<128x128xbf16>, vector<8x128xf32> -> vector<8x128xf32>
    %c0_5 = arith.constant 0 : index
    %c0_6 = arith.constant 0 : index
    %4 = vector.load %arg4[%c0_5, %c0_6] : memref<128x256xbf16, #tpu.memory_space<vmem>>, vector<128x256xbf16>
    %cst_7 = arith.constant dense<0.000000e+00> : vector<8x256xf32>
    %5 = tpu.matmul %1, %4, %cst_7 {dimension_numbers = #tpu.dot_dimension_numbers<[1], [0], [0], [1], [0, 0, 1, 1], [], []>} : vector<8x128xbf16>, vector<128x256xbf16>, vector<8x256xf32> -> vector<8x256xf32>
    %6 = vector.extract_strided_slice %5 {offsets = [0, 0], sizes = [8, 128], strides = [1, 1]} : vector<8x256xf32> to vector<8x128xf32>
    %7 = vector.extract_strided_slice %5 {offsets = [0, 128], sizes = [8, 128], strides = [1, 1]} : vector<8x256xf32> to vector<8x128xf32>
    %8 = arith.mulf %3, %6 : vector<8x128xf32>
    %9 = arith.truncf %8 : vector<8x128xf32> to vector<8x128xbf16>
    %c0_8 = arith.constant 0 : index
    %c0_9 = arith.constant 0 : index
    %10 = vector.load %arg7[%c0_8, %c0_9] : memref<128x128xbf16, #tpu.memory_space<vmem>>, vector<128x128xbf16>
    %cst_10 = arith.constant dense<0.000000e+00> : vector<8x128xf32>
    %11 = tpu.matmul %9, %10, %cst_10 {dimension_numbers = #tpu.dot_dimension_numbers<[1], [0], [0], [1], [0, 0, 1, 1], [], []>} : vector<8x128xbf16>, vector<128x128xbf16>, vector<8x128xf32> -> vector<8x128xf32>
    %cst_11 = arith.constant 1.250000e-01 : f32
    %12 = vector.broadcast %cst_11 : f32 to vector<8x128xf32>
    %13 = arith.mulf %11, %12 : vector<8x128xf32>
    %c0_12 = arith.constant 0 : index
    %c0_13 = arith.constant 0 : index
    %14 = vector.load %arg8[%c0_12, %c0_13] : memref<1x128xf32, #tpu.memory_space<vmem>>, vector<1x128xf32>
    %15 = vector.broadcast %14 : vector<1x128xf32> to vector<8x128xf32>
    %16 = arith.addf %13, %15 : vector<8x128xf32>
    %cst_14 = arith.constant dense<0xFF800000> : vector<8xf32>
    %17 = vector.multi_reduction <maximumf>, %16, %cst_14 [1] : vector<8x128xf32> to vector<8xf32>
    %18 = vector.shape_cast %17 : vector<8xf32> to vector<8x1xf32>
    %19 = vector.broadcast %18 : vector<8x1xf32> to vector<8x128xf32>
    %20 = arith.subf %16, %19 : vector<8x128xf32>
    %21 = math.exp %20 : vector<8x128xf32>
    %cst_15 = arith.constant dense<0.000000e+00> : vector<8xf32>
    %22 = vector.multi_reduction <add>, %21, %cst_15 [1] : vector<8x128xf32> to vector<8xf32>
    %23 = vector.shape_cast %22 : vector<8xf32> to vector<8x1xf32>
    %24 = tpu.reciprocal %23 {approx = true} : vector<8x1xf32> -> vector<8x1xf32>
    %25 = vector.broadcast %24 : vector<8x1xf32> to vector<8x128xf32>
    %26 = arith.mulf %21, %25 : vector<8x128xf32>
    %27 = arith.truncf %26 : vector<8x128xf32> to vector<8x128xbf16>
    %c0_16 = arith.constant 0 : index
    %c0_17 = arith.constant 0 : index
    %28 = vector.load %arg7[%c0_16, %c0_17] : memref<128x128xbf16, #tpu.memory_space<vmem>>, vector<128x128xbf16>
    %cst_18 = arith.constant dense<0.000000e+00> : vector<8x128xf32>
    %29 = tpu.matmul %27, %28, %cst_18 {dimension_numbers = #tpu.dot_dimension_numbers<[1], [1], [0], [0], [0, 0, 1, 0], [], []>} : vector<8x128xbf16>, vector<128x128xbf16>, vector<8x128xf32> -> vector<8x128xf32>
    %30 = arith.truncf %29 : vector<8x128xf32> to vector<8x128xbf16>
    %31 = arith.truncf %7 : vector<8x128xf32> to vector<8x128xbf16>
    %32 = arith.mulf %30, %31 : vector<8x128xbf16>
    %c0_19 = arith.constant 0 : index
    %c0_20 = arith.constant 0 : index
    %33 = vector.load %arg5[%c0_19, %c0_20] : memref<128x128xbf16, #tpu.memory_space<vmem>>, vector<128x128xbf16>
    %cst_21 = arith.constant dense<0.000000e+00> : vector<8x128xf32>
    %34 = tpu.matmul %32, %33, %cst_21 {dimension_numbers = #tpu.dot_dimension_numbers<[1], [0], [0], [1], [0, 0, 1, 1], [], []>} : vector<8x128xbf16>, vector<128x128xbf16>, vector<8x128xf32> -> vector<8x128xf32>
    %c0_22 = arith.constant 0 : index
    %c0_23 = arith.constant 0 : index
    %35 = vector.load %arg6[%c0_22, %c0_23] : memref<1x128xf32, #tpu.memory_space<vmem>>, vector<1x128xf32>
    %36 = vector.broadcast %35 : vector<1x128xf32> to vector<8x128xf32>
    %37 = arith.addf %34, %36 : vector<8x128xf32>
    %c0_24 = arith.constant 0 : index
    %c0_25 = arith.constant 0 : index
    %38 = vector.load %arg9[%c0_24, %c0_25] : memref<8x128xf32, #tpu.memory_space<vmem>>, vector<8x128xf32>
    tpu.vector_store %arg9[%c0_24, %c0_25], %37 {strides = array<i32>} : memref<8x128xf32, #tpu.memory_space<vmem>>, vector<8x128xf32>,
    return
  }
  func.func @transform_0(%arg0: i32) -> (i32, i32) {
    %c0_i32 = arith.constant 0 : i32
    %c0_i32_0 = arith.constant 0 : i32
    return %arg0, %c0_i32 : i32, i32
  }
  func.func @transform_1(%arg0: i32) -> (i32, i32) {
    %c0_i32 = arith.constant 0 : i32
    %c0_i32_0 = arith.constant 0 : i32
    return %arg0, %c0_i32 : i32, i32
  }
  func.func @transform_2(%arg0: i32) -> (i32, i32) {
    %c0_i32 = arith.constant 0 : i32
    %c0_i32_0 = arith.constant 0 : i32
    %c0_i32_1 = arith.constant 0 : i32
    return %c0_i32, %c0_i32_0 : i32, i32
  }
  func.func @transform_3(%arg0: i32) -> (i32, i32) {
    %c0_i32 = arith.constant 0 : i32
    %c0_i32_0 = arith.constant 0 : i32
    %c0_i32_1 = arith.constant 0 : i32
    return %c0_i32, %c0_i32_0 : i32, i32
  }
  func.func @transform_4(%arg0: i32) -> (i32, i32) {
    %c0_i32 = arith.constant 0 : i32
    %c0_i32_0 = arith.constant 0 : i32
    %c0_i32_1 = arith.constant 0 : i32
    return %c0_i32, %c0_i32_0 : i32, i32
  }
  func.func @transform_5(%arg0: i32) -> (i32, i32) {
    %c0_i32 = arith.constant 0 : i32
    %c0_i32_0 = arith.constant 0 : i32
    %c0_i32_1 = arith.constant 0 : i32
    return %c0_i32, %c0_i32_0 : i32, i32
  }
  func.func @transform_6(%arg0: i32) -> (i32, i32) {
    %c0_i32 = arith.constant 0 : i32
    %c0_i32_0 = arith.constant 0 : i32
    %c0_i32_1 = arith.constant 0 : i32
    return %c0_i32, %c0_i32_0 : i32, i32
  }
  func.func @transform_7(%arg0: i32) -> (i32, i32) {
    %c0_i32 = arith.constant 0 : i32
    %c0_i32_0 = arith.constant 0 : i32
    %c0_i32_1 = arith.constant 0 : i32
    return %c0_i32, %c0_i32_0 : i32, i32
  }
  func.func @transform_8(%arg0: i32) -> (i32, i32) {
    %c0_i32 = arith.constant 0 : i32
    %c0_i32_0 = arith.constant 0 : i32
    return %arg0, %c0_i32 : i32, i32
  }
}

module attributes {stable_mosaic.version = 11 : i64} {
  func.func @_cross_attention_kernel(%arg0: i32, %arg1: memref<8x128xbf16, #tpu.memory_space<vmem>>, %arg2: memref<8x128xbf16, #tpu.memory_space<vmem>>, %arg3: memref<128x128xbf16, #tpu.memory_space<vmem>>, %arg4: memref<128x256xbf16, #tpu.memory_space<vmem>>, %arg5: memref<128x128xbf16, #tpu.memory_space<vmem>>, %arg6: memref<1x128xf32, #tpu.memory_space<vmem>>, %arg7: memref<128x128xbf16, #tpu.memory_space<vmem>>, %arg8: memref<1x128xf32, #tpu.memory_space<vmem>>, %arg9: memref<8x128xf32, #tpu.memory_space<vmem>>) attributes {dimension_semantics = [#tpu.dimension_semantics<parallel>], iteration_bounds = array<i64: 1>, scalar_prefetch = 0 : i64, scratch_operands = 0 : i64, tpu.core_type = #tpu.core_type<tc>, window_params = [{transform_indices = @transform_0, window_bounds = array<i64: 8, 128>}, {transform_indices = @transform_1, window_bounds = array<i64: 8, 128>}, {pipeline_mode = #tpu.pipeline_mode<synchronous>, transform_indices = @transform_2, window_bounds = array<i64: 128, 128>}, {pipeline_mode = #tpu.pipeline_mode<synchronous>, transform_indices = @transform_3, window_bounds = array<i64: 128, 256>}, {pipeline_mode = #tpu.pipeline_mode<synchronous>, transform_indices = @transform_4, window_bounds = array<i64: 128, 128>}, {pipeline_mode = #tpu.pipeline_mode<synchronous>, transform_indices = @transform_5, window_bounds = array<i64: 1, 128>}, {pipeline_mode = #tpu.pipeline_mode<synchronous>, transform_indices = @transform_6, window_bounds = array<i64: 128, 128>}, {pipeline_mode = #tpu.pipeline_mode<synchronous>, transform_indices = @transform_7, window_bounds = array<i64: 1, 128>}, {transform_indices = @transform_8, window_bounds = array<i64: 8, 128>}]} {
    %c0 = arith.constant 0 : index
    %c0_0 = arith.constant 0 : index
    %0 = vector.load %arg1[%c0, %c0_0] : memref<8x128xbf16, #tpu.memory_space<vmem>>, vector<8x128xbf16>
    %c0_1 = arith.constant 0 : index
    %c0_2 = arith.constant 0 : index
    %1 = vector.load %arg2[%c0_1, %c0_2] : memref<8x128xbf16, #tpu.memory_space<vmem>>, vector<8x128xbf16>
    %c0_3 = arith.constant 0 : index
    %c0_4 = arith.constant 0 : index
    %2 = vector.load %arg3[%c0_3, %c0_4] : memref<128x128xbf16, #tpu.memory_space<vmem>>, vector<128x128xbf16>
    %cst = arith.constant dense<0.000000e+00> : vector<8x128xf32>
    %3 = tpu.matmul %0, %2, %cst {dimension_numbers = #tpu.dot_dimension_numbers<[1], [0], [0], [1], [0, 0, 1, 1], [], []>} : vector<8x128xbf16>, vector<128x128xbf16>, vector<8x128xf32> -> vector<8x128xf32>
    %c0_5 = arith.constant 0 : index
    %c0_6 = arith.constant 0 : index
    %4 = vector.load %arg4[%c0_5, %c0_6] : memref<128x256xbf16, #tpu.memory_space<vmem>>, vector<128x256xbf16>
    %cst_7 = arith.constant dense<0.000000e+00> : vector<8x256xf32>
    %5 = tpu.matmul %1, %4, %cst_7 {dimension_numbers = #tpu.dot_dimension_numbers<[1], [0], [0], [1], [0, 0, 1, 1], [], []>} : vector<8x128xbf16>, vector<128x256xbf16>, vector<8x256xf32> -> vector<8x256xf32>
    %6 = vector.extract_strided_slice %5 {offsets = [0, 0], sizes = [8, 128], strides = [1, 1]} : vector<8x256xf32> to vector<8x128xf32>
    %7 = vector.extract_strided_slice %5 {offsets = [0, 128], sizes = [8, 128], strides = [1, 1]} : vector<8x256xf32> to vector<8x128xf32>
    %8 = arith.mulf %3, %6 : vector<8x128xf32>
    %9 = arith.truncf %8 : vector<8x128xf32> to vector<8x128xbf16>
    %c0_8 = arith.constant 0 : index
    %c0_9 = arith.constant 0 : index
    %10 = vector.load %arg7[%c0_8, %c0_9] : memref<128x128xbf16, #tpu.memory_space<vmem>>, vector<128x128xbf16>
    %cst_10 = arith.constant dense<0.000000e+00> : vector<8x128xf32>
    %11 = tpu.matmul %9, %10, %cst_10 {dimension_numbers = #tpu.dot_dimension_numbers<[1], [0], [0], [1], [0, 0, 1, 1], [], []>} : vector<8x128xbf16>, vector<128x128xbf16>, vector<8x128xf32> -> vector<8x128xf32>
    %cst_11 = arith.constant 1.250000e-01 : f32
    %12 = vector.broadcast %cst_11 : f32 to vector<8x128xf32>
    %13 = arith.mulf %11, %12 : vector<8x128xf32>
    %c0_12 = arith.constant 0 : index
    %c0_13 = arith.constant 0 : index
    %14 = vector.load %arg8[%c0_12, %c0_13] : memref<1x128xf32, #tpu.memory_space<vmem>>, vector<1x128xf32>
    %15 = vector.broadcast %14 : vector<1x128xf32> to vector<8x128xf32>
    %16 = arith.addf %13, %15 : vector<8x128xf32>
    %cst_14 = arith.constant dense<0xFF800000> : vector<8xf32>
    %17 = vector.multi_reduction <maximumf>, %16, %cst_14 [1] : vector<8x128xf32> to vector<8xf32>
    %18 = vector.shape_cast %17 : vector<8xf32> to vector<8x1xf32>
    %19 = vector.broadcast %18 : vector<8x1xf32> to vector<8x128xf32>
    %20 = arith.subf %16, %19 : vector<8x128xf32>
    %21 = math.exp %20 : vector<8x128xf32>
    %cst_15 = arith.constant dense<0.000000e+00> : vector<8xf32>
    %22 = vector.multi_reduction <add>, %21, %cst_15 [1] : vector<8x128xf32> to vector<8xf32>
    %23 = vector.shape_cast %22 : vector<8xf32> to vector<8x1xf32>
    %24 = tpu.reciprocal %23 {approx = true} : vector<8x1xf32> -> vector<8x1xf32>
    %25 = vector.broadcast %24 : vector<8x1xf32> to vector<8x128xf32>
    %26 = arith.mulf %21, %25 : vector<8x128xf32>
    %27 = arith.truncf %26 : vector<8x128xf32> to vector<8x128xbf16>
    %c0_16 = arith.constant 0 : index
    %c0_17 = arith.constant 0 : index
    %28 = vector.load %arg7[%c0_16, %c0_17] : memref<128x128xbf16, #tpu.memory_space<vmem>>, vector<128x128xbf16>
    %cst_18 = arith.constant dense<0.000000e+00> : vector<8x128xf32>
    %29 = tpu.matmul %27, %28, %cst_18 {dimension_numbers = #tpu.dot_dimension_numbers<[1], [1], [0], [0], [0, 0, 1, 0], [], []>} : vector<8x128xbf16>, vector<128x128xbf16>, vector<8x128xf32> -> vector<8x128xf32>
    %30 = arith.truncf %29 : vector<8x128xf32> to vector<8x128xbf16>
    %31 = arith.truncf %7 : vector<8x128xf32> to vector<8x128xbf16>
    %32 = arith.mulf %30, %31 : vector<8x128xbf16>
    %c0_19 = arith.constant 0 : index
    %c0_20 = arith.constant 0 : index
    %33 = vector.load %arg5[%c0_19, %c0_20] : memref<128x128xbf16, #tpu.memory_space<vmem>>, vector<128x128xbf16>
    %cst_21 = arith.constant dense<0.000000e+00> : vector<8x128xf32>
    %34 = tpu.matmul %32, %33, %cst_21 {dimension_numbers = #tpu.dot_dimension_numbers<[1], [0], [0], [1], [0, 0, 1, 1], [], []>} : vector<8x128xbf16>, vector<128x128xbf16>, vector<8x128xf32> -> vector<8x128xf32>
    %c0_22 = arith.constant 0 : index
    %c0_23 = arith.constant 0 : index
    %35 = vector.load %arg6[%c0_22, %c0_23] : memref<1x128xf32, #tpu.memory_space<vmem>>, vector<1x128xf32>
    %36 = vector.broadcast %35 : vector<1x128xf32> to vector<8x128xf32>
    %37 = arith.addf %34, %36 : vector<8x128xf32>
    %c0_24 = arith.constant 0 : index
    %c0_25 = arith.constant 0 : index
    %38 = vector.load %arg9[%c0_24, %c0_25] : memref<8x128xf32, #tpu.memory_space<vmem>>, vector<8x128xf32>
    tpu.vector_store %arg9[%c0_24, %c0_25], %37 {strides = array<i32>} : memref<8x128xf32, #tpu.memory_space<vmem>>, vector<8x128xf32>,
    return
  }
  func.func @transform_0(%arg0: i32) -> (i32, i32) {
    %c0_i32 = arith.constant 0 : i32
    %c0_i32_0 = arith.constant 0 : i32
    return %arg0, %c0_i32 : i32, i32
  }
  func.func @transform_1(%arg0: i32) -> (i32, i32) {
    %c0_i32 = arith.constant 0 : i32
    %c0_i32_0 = arith.constant 0 : i32
    return %arg0, %c0_i32 : i32, i32
  }
  func.func @transform_2(%arg0: i32) -> (i32, i32) {
    %c0_i32 = arith.constant 0 : i32
    %c0_i32_0 = arith.constant 0 : i32
    %c0_i32_1 = arith.constant 0 : i32
    return %c0_i32, %c0_i32_0 : i32, i32
  }
  func.func @transform_3(%arg0: i32) -> (i32, i32) {
    %c0_i32 = arith.constant 0 : i32
    %c0_i32_0 = arith.constant 0 : i32
    %c0_i32_1 = arith.constant 0 : i32
    return %c0_i32, %c0_i32_0 : i32, i32
  }
  func.func @transform_4(%arg0: i32) -> (i32, i32) {
    %c0_i32 = arith.constant 0 : i32
    %c0_i32_0 = arith.constant 0 : i32
    %c0_i32_1 = arith.constant 0 : i32
    return %c0_i32, %c0_i32_0 : i32, i32
  }
  func.func @transform_5(%arg0: i32) -> (i32, i32) {
    %c0_i32 = arith.constant 0 : i32
    %c0_i32_0 = arith.constant 0 : i32
    %c0_i32_1 = arith.constant 0 : i32
    return %c0_i32, %c0_i32_0 : i32, i32
  }
  func.func @transform_6(%arg0: i32) -> (i32, i32) {
    %c0_i32 = arith.constant 0 : i32
    %c0_i32_0 = arith.constant 0 : i32
    %c0_i32_1 = arith.constant 0 : i32
    return %c0_i32, %c0_i32_0 : i32, i32
  }
  func.func @transform_7(%arg0: i32) -> (i32, i32) {
    %c0_i32 = arith.constant 0 : i32
    %c0_i32_0 = arith.constant 0 : i32
    %c0_i32_1 = arith.constant 0 : i32
    return %c0_i32, %c0_i32_0 : i32, i32
  }
  func.func @transform_8(%arg0: i32) -> (i32, i32) {
    %c0_i32 = arith.constant 0 : i32
    %c0_i32_0 = arith.constant 0 : i32
    return %arg0, %c0_i32 : i32, i32
  }
}

</mosaic_0001>

<llo_original>
// kernel: tpu_custom_call.1
$region0: #{tpu_custom_call.1}
  #allocation0 [shape = 'u32[]', space=smem, size = 0x4, offset = 0x4, fixed_abs, tag = 'smem constant byte address 0x4 - core index']
  #allocation1 [shape = 'u32[144,128]{1,0:T(1,128)}', space=vmem, size = 0x12000, scoped, tag = 'internal scratch']
  %s0 = inlined_call_operand.hbm [shape: bf16[8,128], index: 0, kind: input, shape index: {}]
  %s1 = inlined_call_operand.hbm [shape: bf16[8,128], index: 1, kind: input, shape index: {}]
  %s2 = inlined_call_operand.hbm [shape: bf16[128,128], index: 2, kind: input, shape index: {}]
  %s3 = inlined_call_operand.hbm [shape: bf16[128,256], index: 3, kind: input, shape index: {}]
  %s4 = inlined_call_operand.hbm [shape: bf16[128,128], index: 4, kind: input, shape index: {}]
  %s5 = inlined_call_operand.vmem [shape: f32[1,128], index: 5, kind: input, shape index: {}]
  %s6 = inlined_call_operand.hbm [shape: bf16[128,128], index: 6, kind: input, shape index: {}]
  %s7 = inlined_call_operand.vmem [shape: f32[1,128], index: 7, kind: input, shape index: {}]
  %s8 = inlined_call_operand.hbm [shape: f32[8,128], index: 8, kind: output, shape index: {}]
  %s9 = sld [smem:[#allocation0]]
  $region66: #{tpu_custom_call.1} parent=0
    _
  %s11 = ssub.s32 1, %s9
  %s12 = scalar_select 0, %s11, %s9
  $region1: #{tpu_custom_call.1} parent=0
    #allocation2 [shape = 'u8[2048]{0}', space=vmem, size = 0x800, scoped, tag = 'input window, operand 0, single buffered']
    #allocation3 [shape = 's32[1]{0}', space=sflag, size = 0x4, scoped, tag = 'scoped memory for tpu_custom_call.1']
    #allocation4 [shape = 's32[1]{0}', space=sflag, size = 0x4, scoped, tag = 'scoped memory for tpu_custom_call.1']
    #allocation5 [shape = 'u8[2048]{0}', space=vmem, size = 0x800, scoped, tag = 'input window, operand 1, single buffered']
    #allocation6 [shape = 's32[1]{0}', space=sflag, size = 0x4, scoped, tag = 'scoped memory for tpu_custom_call.1']
    #allocation7 [shape = 'u8[32768]{0}', space=vmem, size = 0x8000, scoped, tag = 'input window, operand 2, single buffered']
    #allocation8 [shape = 'u8[65536]{0}', space=vmem, size = 0x10000, scoped, tag = 'input window, operand 3, single buffered']
    #allocation9 [shape = 's32[1]{0}', space=sflag, size = 0x4, scoped, tag = 'scoped memory for tpu_custom_call.1']
    #allocation10 [shape = 'u8[32768]{0}', space=vmem, size = 0x8000, scoped, tag = 'input window, operand 4, single buffered']
    #allocation11 [shape = 'u8[32768]{0}', space=vmem, size = 0x8000, scoped, tag = 'input window, operand 6, single buffered']
    #allocation12 [shape = 's32[1]{0}', space=sflag, size = 0x4, scoped, tag = 'scoped memory for tpu_custom_call.1']
    #allocation13 [shape = 'u8[4096]{0}', space=vmem, size = 0x1000, scoped, tag = 'output window, operand 0, single buffered']
    %13 = vsyncpa [#allocation3], 0
    %14 = vsyncpa [#allocation6], 0
    %15 = vsyncpa [#allocation9], 0
    %16 = vsyncpa [#allocation12], 0
    %17 = vsyncpa [#allocation4], 0
    // Predicated region
    $region2: #{tpu_custom_call.1} parent=1 // pred_check
      _
    $region3: #{tpu_custom_call.1} parent=1 // pred_check_branch
      %19 = sbr.rel (0) target = $region5
    $region4: #{tpu_custom_call.1} parent=1 // pred_region
      %s21 = ssub.s32 64, 64
      %22 = vsyncadd [#allocation3], %s21
      %s24 = sshll.u32 [#allocation2], 4
      %s25 = int_to_ptr.vmem [resolvable:$true] %s24
      %27 = dma.hbm_to_vmem [thread:$0]  %s0, 64, %s25, [#allocation3]
    $region5: #{tpu_custom_call.1} parent=1 // pred_fallthru
      _
    // Predicated region
    $region6: #{tpu_custom_call.1} parent=1 // pred_check
      _
    $region7: #{tpu_custom_call.1} parent=1 // pred_check_branch
      %29 = sbr.rel (0) target = $region9
    $region8: #{tpu_custom_call.1} parent=1 // pred_region
      %s31 = ssub.s32 64, 64
      %32 = vsyncadd [#allocation6], %s31
      %s34 = sshll.u32 [#allocation5], 4
      %s35 = int_to_ptr.vmem [resolvable:$true] %s34
      %37 = dma.hbm_to_vmem [thread:$0]  %s1, 64, %s35, [#allocation6]
    $region9: #{tpu_custom_call.1} parent=1 // pred_fallthru
      _
    // Predicated region
    $region10: #{tpu_custom_call.1} parent=1 // pred_check
      _
    $region11: #{tpu_custom_call.1} parent=1 // pred_check_branch
      %39 = sbr.rel (0) target = $region13
    $region12: #{tpu_custom_call.1} parent=1 // pred_region
      %s41 = ssub.s32 1024, 1024
      %42 = vsyncadd [#allocation6], %s41
      %s43 = sshll.u32 [#allocation7], 4
      %s44 = int_to_ptr.vmem [resolvable:$true] %s43
      %49 = dma.hbm_to_vmem [thread:$0]  %s2, 1024, %s44, [#allocation6], 64, 64, 4
    $region13: #{tpu_custom_call.1} parent=1 // pred_fallthru
      _
    // Predicated region
    $region14: #{tpu_custom_call.1} parent=1 // pred_check
      _
    $region15: #{tpu_custom_call.1} parent=1 // pred_check_branch
      %51 = sbr.rel (0) target = $region17
    $region16: #{tpu_custom_call.1} parent=1 // pred_region
      %s53 = ssub.s32 2048, 2048
      %54 = vsyncadd [#allocation9], %s53
      %s55 = sshll.u32 [#allocation8], 4
      %s56 = int_to_ptr.vmem [resolvable:$true] %s55
      %61 = dma.hbm_to_vmem [thread:$0]  %s3, 2048, %s56, [#allocation9], 128, 128, 8
    $region17: #{tpu_custom_call.1} parent=1 // pred_fallthru
      _
    // Predicated region
    $region18: #{tpu_custom_call.1} parent=1 // pred_check
      _
    $region19: #{tpu_custom_call.1} parent=1 // pred_check_branch
      %63 = sbr.rel (0) target = $region21
    $region20: #{tpu_custom_call.1} parent=1 // pred_region
      %s65 = ssub.s32 1024, 1024
      %66 = vsyncadd [#allocation9], %s65
      %s67 = sshll.u32 [#allocation10], 4
      %s68 = int_to_ptr.vmem [resolvable:$true] %s67
      %73 = dma.hbm_to_vmem [thread:$0]  %s4, 1024, %s68, [#allocation9], 64, 64, 4
    $region21: #{tpu_custom_call.1} parent=1 // pred_fallthru
      _
    // Predicated region
    $region22: #{tpu_custom_call.1} parent=1 // pred_check
      _
    $region23: #{tpu_custom_call.1} parent=1 // pred_check_branch
      %75 = sbr.rel (0) target = $region25
    $region24: #{tpu_custom_call.1} parent=1 // pred_region
      _
    $region25: #{tpu_custom_call.1} parent=1 // pred_fallthru
      _
    // Predicated region
    $region26: #{tpu_custom_call.1} parent=1 // pred_check
      _
    $region27: #{tpu_custom_call.1} parent=1 // pred_check_branch
      %77 = sbr.rel (0) target = $region29
    $region28: #{tpu_custom_call.1} parent=1 // pred_region
      %s79 = ssub.s32 1024, 1024
      %80 = vsyncadd [#allocation12], %s79
      %s81 = sshll.u32 [#allocation11], 4
      %s82 = int_to_ptr.vmem [resolvable:$true] %s81
      %87 = dma.hbm_to_vmem [thread:$0]  %s6, 1024, %s82, [#allocation12], 64, 64, 4
    $region29: #{tpu_custom_call.1} parent=1 // pred_fallthru
      _
    // Predicated region
    $region30: #{tpu_custom_call.1} parent=1 // pred_check
      _
    $region31: #{tpu_custom_call.1} parent=1 // pred_check_branch
      %89 = sbr.rel (0) target = $region33
    $region32: #{tpu_custom_call.1} parent=1 // pred_region
      _
    $region33: #{tpu_custom_call.1} parent=1 // pred_fallthru
      _
    // Predicated region
    $region34: #{tpu_custom_call.1} parent=1 // pred_check
      _
    $region35: #{tpu_custom_call.1} parent=1 // pred_check_branch
      %91 = sbr.rel (0) target = $region37
    $region36: #{tpu_custom_call.1} parent=1 // pred_region
      %92 = dma.done [#allocation3], 64
    $region37: #{tpu_custom_call.1} parent=1 // pred_fallthru
      _
    // Predicated region
    $region38: #{tpu_custom_call.1} parent=1 // pred_check
      _
    $region39: #{tpu_custom_call.1} parent=1 // pred_check_branch
      %94 = sbr.rel (0) target = $region41
    $region40: #{tpu_custom_call.1} parent=1 // pred_region
      %95 = dma.done [#allocation6], 64
    $region41: #{tpu_custom_call.1} parent=1 // pred_fallthru
      _
    // Predicated region
    $region42: #{tpu_custom_call.1} parent=1 // pred_check
      _
    $region43: #{tpu_custom_call.1} parent=1 // pred_check_branch
      %97 = sbr.rel (0) target = $region45
    $region44: #{tpu_custom_call.1} parent=1 // pred_region
      %98 = dma.done [#allocation6], 1024
    $region45: #{tpu_custom_call.1} parent=1 // pred_fallthru
      _
    // Predicated region
    $region46: #{tpu_custom_call.1} parent=1 // pred_check
      _
    $region47: #{tpu_custom_call.1} parent=1 // pred_check_branch
      %100 = sbr.rel (0) target = $region49
    $region48: #{tpu_custom_call.1} parent=1 // pred_region
      %101 = dma.done [#allocation9], 2048
    $region49: #{tpu_custom_call.1} parent=1 // pred_fallthru
      _
    // Predicated region
    $region50: #{tpu_custom_call.1} parent=1 // pred_check
      _
    $region51: #{tpu_custom_call.1} parent=1 // pred_check_branch
      %103 = sbr.rel (0) target = $region53
    $region52: #{tpu_custom_call.1} parent=1 // pred_region
      %104 = dma.done [#allocation9], 1024
    $region53: #{tpu_custom_call.1} parent=1 // pred_fallthru
      _
    // Predicated region
    $region54: #{tpu_custom_call.1} parent=1 // pred_check
      _
    $region55: #{tpu_custom_call.1} parent=1 // pred_check_branch
      %106 = sbr.rel (0) target = $region57
    $region56: #{tpu_custom_call.1} parent=1 // pred_region
      %107 = dma.done [#allocation12], 1024
    $region57: #{tpu_custom_call.1} parent=1 // pred_fallthru
      _
    %v109 = vld [vmem:[#allocation2] sm:$0xf]
    %v110 = vld [vmem:[#allocation5] sm:$0xf]
    %v111 = vld [vmem:[#allocation7] sm:$0xf]
    %v112 = vld [vmem:[#allocation7 + $0x4] sm:$0xf]
    %v113 = vld [vmem:[#allocation7 + $0x8] sm:$0xf]
    %v114 = vld [vmem:[#allocation7 + $0xc] sm:$0xf]
    %v115 = vld [vmem:[#allocation7 + $0x10] sm:$0xf]
    %v116 = vld [vmem:[#allocation7 + $0x14] sm:$0xf]
    %v117 = vld [vmem:[#allocation7 + $0x18] sm:$0xf]
    %v118 = vld [vmem:[#allocation7 + $0x1c] sm:$0xf]
    %v119 = vld [vmem:[#allocation7 + $0x20] sm:$0xf]
    %v120 = vld [vmem:[#allocation7 + $0x24] sm:$0xf]
    %v121 = vld [vmem:[#allocation7 + $0x28] sm:$0xf]
    %v122 = vld [vmem:[#allocation7 + $0x2c] sm:$0xf]
    %v123 = vld [vmem:[#allocation7 + $0x30] sm:$0xf]
    %v124 = vld [vmem:[#allocation7 + $0x34] sm:$0xf]
    %v125 = vld [vmem:[#allocation7 + $0x38] sm:$0xf]
    %v126 = vld [vmem:[#allocation7 + $0x3c] sm:$0xf]
    %v143 = vunpack.c.l.b16 %v111
    %v144 = vunpack.c.l.b16 %v112
    %v145 = vunpack.c.l.b16 %v113
    %v146 = vunpack.c.l.b16 %v114
    %v147 = vunpack.c.l.b16 %v115
    %v148 = vunpack.c.l.b16 %v116
    %v149 = vunpack.c.l.b16 %v117
    %v150 = vunpack.c.l.b16 %v118
    %v151 = vunpack.c.l.b16 %v119
    %v152 = vunpack.c.l.b16 %v120
    %v153 = vunpack.c.l.b16 %v121
    %v154 = vunpack.c.l.b16 %v122
    %v155 = vunpack.c.l.b16 %v123
    %v156 = vunpack.c.l.b16 %v124
    %v157 = vunpack.c.l.b16 %v125
    %v158 = vunpack.c.l.b16 %v126
    %v159 = vpack.c.b16 %v144, %v143
    %v160 = vpack.c.b16 %v146, %v145
    %v161 = vpack.c.b16 %v148, %v147
    %v162 = vpack.c.b16 %v150, %v149
    %v163 = vpack.c.b16 %v152, %v151
    %v164 = vpack.c.b16 %v154, %v153
    %v165 = vpack.c.b16 %v156, %v155
    %v166 = vpack.c.b16 %v158, %v157
    %175 = vmatprep.subr.bf16.mxu0 0
    %176 = vmatpush1.bf16.msra.mxu0 %v159
    %177 = vmatprep.subr.bf16.mxu0 0
    %178 = vmatpush1.bf16.msra.mxu0 %v160
    %179 = vmatprep.subr.bf16.mxu0 0
    %180 = vmatpush1.bf16.msra.mxu0 %v161
    %181 = vmatprep.subr.bf16.mxu0 0
    %182 = vmatpush1.bf16.msra.mxu0 %v162
    %183 = vmatprep.subr.bf16.mxu0 0
    %184 = vmatpush1.bf16.msra.mxu0 %v163
    %185 = vmatprep.subr.bf16.mxu0 0
    %186 = vmatpush1.bf16.msra.mxu0 %v164
    %187 = vmatprep.subr.bf16.mxu0 0
    %188 = vmatpush1.bf16.msra.mxu0 %v165
    %189 = vmatprep.subr.bf16.mxu0 0
    %190 = vmatpush1.bf16.msra.mxu0 %v166
    %191 = vmatprep.subr.bf16.mxu0 0
    %192 = vmatpush1.bf16.msra.mxu0 0
    %193 = vmatprep.subr.bf16.mxu0 0
    %194 = vmatpush1.bf16.msra.mxu0 0
    %195 = vmatprep.subr.bf16.mxu0 0
    %196 = vmatpush1.bf16.msra.mxu0 0
    %197 = vmatprep.subr.bf16.mxu0 0
    %198 = vmatpush1.bf16.msra.mxu0 0
    %199 = vmatprep.subr.bf16.mxu0 0
    %200 = vmatpush1.bf16.msra.mxu0 0
    %201 = vmatprep.subr.bf16.mxu0 0
    %202 = vmatpush1.bf16.msra.mxu0 0
    %203 = vmatprep.subr.bf16.mxu0 0
    %204 = vmatpush1.bf16.msra.mxu0 0
    %205 = vmatprep.subr.bf16.mxu0 0
    %206 = vmatpush1.bf16.msra.mxu0 0
    %207 = vmatprep.mubr.bf16.mxu0 0
    %208 = vmatmul.mubr.bf16.gmra.mrb[0].mxu0 %v109
    %v209 = vpop.f32.mrb[0].mxu0
    %v210 = vadd.f32 0.0, %v209
    %v211 = vpop.f32.mrb[0].mxu0
    %v212 = vpop.f32.mrb[0].mxu0
    %v213 = vpop.f32.mrb[0].mxu0
    %214 = vdwg.mxu0
    %v215 = vld [vmem:[#allocation8] sm:$0xff]
    %v216 = vld [vmem:[#allocation8 + $0x8] sm:$0xff]
    %v217 = vld [vmem:[#allocation8 + $0x10] sm:$0xff]
    %v218 = vld [vmem:[#allocation8 + $0x18] sm:$0xff]
    %v219 = vld [vmem:[#allocation8 + $0x20] sm:$0xff]
    %v220 = vld [vmem:[#allocation8 + $0x28] sm:$0xff]
    %v221 = vld [vmem:[#allocation8 + $0x30] sm:$0xff]
    %v222 = vld [vmem:[#allocation8 + $0x38] sm:$0xff]
    %v223 = vld [vmem:[#allocation8 + $0x40] sm:$0xff]
    %v224 = vld [vmem:[#allocation8 + $0x48] sm:$0xff]
    %v225 = vld [vmem:[#allocation8 + $0x50] sm:$0xff]
    %v226 = vld [vmem:[#allocation8 + $0x58] sm:$0xff]
    %v227 = vld [vmem:[#allocation8 + $0x60] sm:$0xff]
    %v228 = vld [vmem:[#allocation8 + $0x68] sm:$0xff]
    %v229 = vld [vmem:[#allocation8 + $0x70] sm:$0xff]
    %v230 = vld [vmem:[#allocation8 + $0x78] sm:$0xff]
    %v247 = vunpack.c.l.b16 %v215
    %v248 = vunpack.c.h.b16 %v215
    %v249 = vunpack.c.l.b16 %v216
    %v250 = vunpack.c.h.b16 %v216
    %v251 = vunpack.c.l.b16 %v217
    %v252 = vunpack.c.h.b16 %v217
    %v253 = vunpack.c.l.b16 %v218
    %v254 = vunpack.c.h.b16 %v218
    %v255 = vunpack.c.l.b16 %v219
    %v256 = vunpack.c.h.b16 %v219
    %v257 = vunpack.c.l.b16 %v220
    %v258 = vunpack.c.h.b16 %v220
    %v259 = vunpack.c.l.b16 %v221
    %v260 = vunpack.c.h.b16 %v221
    %v261 = vunpack.c.l.b16 %v222
    %v262 = vunpack.c.h.b16 %v222
    %v263 = vunpack.c.l.b16 %v223
    %v264 = vunpack.c.h.b16 %v223
    %v265 = vunpack.c.l.b16 %v224
    %v266 = vunpack.c.h.b16 %v224
    %v267 = vunpack.c.l.b16 %v225
    %v268 = vunpack.c.h.b16 %v225
    %v269 = vunpack.c.l.b16 %v226
    %v270 = vunpack.c.h.b16 %v226
    %v271 = vunpack.c.l.b16 %v227
    %v272 = vunpack.c.h.b16 %v227
    %v273 = vunpack.c.l.b16 %v228
    %v274 = vunpack.c.h.b16 %v228
    %v275 = vunpack.c.l.b16 %v229
    %v276 = vunpack.c.h.b16 %v229
    %v277 = vunpack.c.l.b16 %v230
    %v278 = vunpack.c.h.b16 %v230
    %v279 = vpack.c.b16 %v249, %v247
    %v280 = vpack.c.b16 %v250, %v248
    %v281 = vpack.c.b16 %v253, %v251
    %v282 = vpack.c.b16 %v254, %v252
    %v283 = vpack.c.b16 %v257, %v255
    %v284 = vpack.c.b16 %v258, %v256
    %v285 = vpack.c.b16 %v261, %v259
    %v286 = vpack.c.b16 %v262, %v260
    %v287 = vpack.c.b16 %v265, %v263
    %v288 = vpack.c.b16 %v266, %v264
    %v289 = vpack.c.b16 %v269, %v267
    %v290 = vpack.c.b16 %v270, %v268
    %v291 = vpack.c.b16 %v273, %v271
    %v292 = vpack.c.b16 %v274, %v272
    %v293 = vpack.c.b16 %v277, %v275
    %v294 = vpack.c.b16 %v278, %v276
    %311 = vmatprep.subr.bf16.mxu0 %v280
    %312 = vmatpush1.bf16.msra.mxu0 %v279
    %313 = vmatprep.subr.bf16.mxu0 %v282
    %314 = vmatpush1.bf16.msra.mxu0 %v281
    %315 = vmatprep.subr.bf16.mxu0 %v284
    %316 = vmatpush1.bf16.msra.mxu0 %v283
    %317 = vmatprep.subr.bf16.mxu0 %v286
    %318 = vmatpush1.bf16.msra.mxu0 %v285
    %319 = vmatprep.subr.bf16.mxu0 %v288
    %320 = vmatpush1.bf16.msra.mxu0 %v287
    %321 = vmatprep.subr.bf16.mxu0 %v290
    %322 = vmatpush1.bf16.msra.mxu0 %v289
    %323 = vmatprep.subr.bf16.mxu0 %v292
    %324 = vmatpush1.bf16.msra.mxu0 %v291
    %325 = vmatprep.subr.bf16.mxu0 %v294
    %326 = vmatpush1.bf16.msra.mxu0 %v293
    %327 = vmatprep.subr.bf16.mxu0 0
    %328 = vmatpush1.bf16.msra.mxu0 0
    %329 = vmatprep.subr.bf16.mxu0 0
    %330 = vmatpush1.bf16.msra.mxu0 0
    %331 = vmatprep.subr.bf16.mxu0 0
    %332 = vmatpush1.bf16.msra.mxu0 0
    %333 = vmatprep.subr.bf16.mxu0 0
    %334 = vmatpush1.bf16.msra.mxu0 0
    %335 = vmatprep.subr.bf16.mxu0 0
    %336 = vmatpush1.bf16.msra.mxu0 0
    %337 = vmatprep.subr.bf16.mxu0 0
    %338 = vmatpush1.bf16.msra.mxu0 0
    %339 = vmatprep.subr.bf16.mxu0 0
    %340 = vmatpush1.bf16.msra.mxu0 0
    %341 = vmatprep.subr.bf16.mxu0 0
    %342 = vmatpush1.bf16.msra.mxu0 0
    %343 = vmatprep.mubr.bf16.mxu0 0
    %344 = vmatmul.mubr.bf16.gmra.mrb[0].mxu0 %v110
    %v345 = vpop.f32.mrb[0].mxu0
    %v346 = vadd.f32 0.0, %v345
    %v347 = vpop.f32.mrb[0].mxu0
    %v348 = vadd.f32 0.0, %v347
    %v349 = vpop.f32.mrb[0].mxu0
    %v350 = vpop.f32.mrb[0].mxu0
    %351 = vdwg.mxu0
    %v352 = vmul.f32 %v210, %v346
    %v353 = vpack.c.bf16 %v352, %v352
    %v354 = vld [vmem:[#allocation11] sm:$0xf]
    %v355 = vld [vmem:[#allocation11 + $0x4] sm:$0xf]
    %v356 = vld [vmem:[#allocation11 + $0x8] sm:$0xf]
    %v357 = vld [vmem:[#allocation11 + $0xc] sm:$0xf]
    %v358 = vld [vmem:[#allocation11 + $0x10] sm:$0xf]
    %v359 = vld [vmem:[#allocation11 + $0x14] sm:$0xf]
    %v360 = vld [vmem:[#allocation11 + $0x18] sm:$0xf]
    %v361 = vld [vmem:[#allocation11 + $0x1c] sm:$0xf]
    %v362 = vld [vmem:[#allocation11 + $0x20] sm:$0xf]
    %v363 = vld [vmem:[#allocation11 + $0x24] sm:$0xf]
    %v364 = vld [vmem:[#allocation11 + $0x28] sm:$0xf]
    %v365 = vld [vmem:[#allocation11 + $0x2c] sm:$0xf]
    %v366 = vld [vmem:[#allocation11 + $0x30] sm:$0xf]
    %v367 = vld [vmem:[#allocation11 + $0x34] sm:$0xf]
    %v368 = vld [vmem:[#allocation11 + $0x38] sm:$0xf]
    %v369 = vld [vmem:[#allocation11 + $0x3c] sm:$0xf]
    %v386 = vunpack.c.l.b16 %v354
    %v387 = vunpack.c.l.b16 %v355
    %v388 = vunpack.c.l.b16 %v356
    %v389 = vunpack.c.l.b16 %v357
    %v390 = vunpack.c.l.b16 %v358
    %v391 = vunpack.c.l.b16 %v359
    %v392 = vunpack.c.l.b16 %v360
    %v393 = vunpack.c.l.b16 %v361
    %v394 = vunpack.c.l.b16 %v362
    %v395 = vunpack.c.l.b16 %v363
    %v396 = vunpack.c.l.b16 %v364
    %v397 = vunpack.c.l.b16 %v365
    %v398 = vunpack.c.l.b16 %v366
    %v399 = vunpack.c.l.b16 %v367
    %v400 = vunpack.c.l.b16 %v368
    %v401 = vunpack.c.l.b16 %v369
    %v402 = vpack.c.b16 %v387, %v386
    %v403 = vpack.c.b16 %v389, %v388
    %v404 = vpack.c.b16 %v391, %v390
    %v405 = vpack.c.b16 %v393, %v392
    %v406 = vpack.c.b16 %v395, %v394
    %v407 = vpack.c.b16 %v397, %v396
    %v408 = vpack.c.b16 %v399, %v398
    %v409 = vpack.c.b16 %v401, %v400
    %418 = vmatprep.subr.bf16.mxu0 0
    %419 = vmatpush1.bf16.msra.mxu0 %v402
    %420 = vmatprep.subr.bf16.mxu0 0
    %421 = vmatpush1.bf16.msra.mxu0 %v403
    %422 = vmatprep.subr.bf16.mxu0 0
    %423 = vmatpush1.bf16.msra.mxu0 %v404
    %424 = vmatprep.subr.bf16.mxu0 0
    %425 = vmatpush1.bf16.msra.mxu0 %v405
    %426 = vmatprep.subr.bf16.mxu0 0
    %427 = vmatpush1.bf16.msra.mxu0 %v406
    %428 = vmatprep.subr.bf16.mxu0 0
    %429 = vmatpush1.bf16.msra.mxu0 %v407
    %430 = vmatprep.subr.bf16.mxu0 0
    %431 = vmatpush1.bf16.msra.mxu0 %v408
    %432 = vmatprep.subr.bf16.mxu0 0
    %433 = vmatpush1.bf16.msra.mxu0 %v409
    %434 = vmatprep.subr.bf16.mxu0 0
    %435 = vmatpush1.bf16.msra.mxu0 0
    %436 = vmatprep.subr.bf16.mxu0 0
    %437 = vmatpush1.bf16.msra.mxu0 0
    %438 = vmatprep.subr.bf16.mxu0 0
    %439 = vmatpush1.bf16.msra.mxu0 0
    %440 = vmatprep.subr.bf16.mxu0 0
    %441 = vmatpush1.bf16.msra.mxu0 0
    %442 = vmatprep.subr.bf16.mxu0 0
    %443 = vmatpush1.bf16.msra.mxu0 0
    %444 = vmatprep.subr.bf16.mxu0 0
    %445 = vmatpush1.bf16.msra.mxu0 0
    %446 = vmatprep.subr.bf16.mxu0 0
    %447 = vmatpush1.bf16.msra.mxu0 0
    %448 = vmatprep.subr.bf16.mxu0 0
    %449 = vmatpush1.bf16.msra.mxu0 0
    %450 = vmatprep.mubr.bf16.mxu0 0
    %451 = vmatmul.mubr.bf16.gmra.mrb[0].mxu0 %v353
    %v452 = vpop.f32.mrb[0].mxu0
    %v453 = vadd.f32 0.0, %v452
    %v454 = vpop.f32.mrb[0].mxu0
    %v455 = vpop.f32.mrb[0].mxu0
    %v456 = vpop.f32.mrb[0].mxu0
    %457 = vdwg.mxu0
    %v458 = vmul.f32 %v453, 0.125
    %v459 = vld [vmem:[%s7] sm:$0x1]
    %v461 = vlaneseq
    %v462 = vshrl.u32 %v461, 7
    %v463 = vsub.s32 0, %v462
    %v464 = vrot.slane %v459, %v463
    %v466 = vadd.f32 %v458, %v464
    %467 = vmax.xlane.f32.xlu0 %v466
    %v468 = vpop.xlane.xlu0 %467
    %v469 = vsub.f32 %v466, %v468
    %v470 = vmul.f32 %v469, 1.442695
    %v471 = vpow.pop %v470
    %472 = vadd.xlane.f32.xlu0 %v471
    %v473 = vpop.xlane.xlu0 %472
    %v474 = vrcp.pop %v473
    %v475 = vmul.f32 %v471, %v474
    %v476 = vpack.c.bf16 %v475, %v475
    %477 = vmatprep.subr.bf16.mxu0 0
    %478 = vmatpush1.bf16.xpose.msra.mxu0 %v402
    %479 = vmatprep.subr.bf16.mxu0 0
    %480 = vmatpush1.bf16.xpose.msra.mxu0 %v403
    %481 = vmatprep.subr.bf16.mxu0 0
    %482 = vmatpush1.bf16.xpose.msra.mxu0 %v404
    %483 = vmatprep.subr.bf16.mxu0 0
    %484 = vmatpush1.bf16.xpose.msra.mxu0 %v405
    %485 = vmatprep.subr.bf16.mxu0 0
    %486 = vmatpush1.bf16.xpose.msra.mxu0 %v406
    %487 = vmatprep.subr.bf16.mxu0 0
    %488 = vmatpush1.bf16.xpose.msra.mxu0 %v407
    %489 = vmatprep.subr.bf16.mxu0 0
    %490 = vmatpush1.bf16.xpose.msra.mxu0 %v408
    %491 = vmatprep.subr.bf16.mxu0 0
    %492 = vmatpush1.bf16.xpose.msra.mxu0 %v409
    %493 = vmatprep.subr.bf16.mxu0 0
    %494 = vmatpush1.bf16.xpose.msra.mxu0 0
    %495 = vmatprep.subr.bf16.mxu0 0
    %496 = vmatpush1.bf16.xpose.msra.mxu0 0
    %497 = vmatprep.subr.bf16.mxu0 0
    %498 = vmatpush1.bf16.xpose.msra.mxu0 0
    %499 = vmatprep.subr.bf16.mxu0 0
    %500 = vmatpush1.bf16.xpose.msra.mxu0 0
    %501 = vmatprep.subr.bf16.mxu0 0
    %502 = vmatpush1.bf16.xpose.msra.mxu0 0
    %503 = vmatprep.subr.bf16.mxu0 0
    %504 = vmatpush1.bf16.xpose.msra.mxu0 0
    %505 = vmatprep.subr.bf16.mxu0 0
    %506 = vmatpush1.bf16.xpose.msra.mxu0 0
    %507 = vmatprep.subr.bf16.mxu0 0
    %508 = vmatpush1.bf16.xpose.msra.mxu0 0
    %509 = vmatprep.mubr.bf16.mxu0 0
    %510 = vmatmul.mubr.bf16.gmra.mrb[0].mxu0 %v476
    %v511 = vpop.f32.mrb[0].mxu0
    %v512 = vadd.f32 0.0, %v511
    %v513 = vpop.f32.mrb[0].mxu0
    %v514 = vpop.f32.mrb[0].mxu0
    %v515 = vpop.f32.mrb[0].mxu0
    %516 = vdwg.mxu0
    %v517 = vpack.c.bf16 %v512, %v512
    %v518 = vpack.c.bf16 %v348, %v348
    %v519 = vmul.bf16 %v517, %v518
    %v520 = vld [vmem:[#allocation10] sm:$0xf]
    %v521 = vld [vmem:[#allocation10 + $0x4] sm:$0xf]
    %v522 = vld [vmem:[#allocation10 + $0x8] sm:$0xf]
    %v523 = vld [vmem:[#allocation10 + $0xc] sm:$0xf]
    %v524 = vld [vmem:[#allocation10 + $0x10] sm:$0xf]
    %v525 = vld [vmem:[#allocation10 + $0x14] sm:$0xf]
    %v526 = vld [vmem:[#allocation10 + $0x18] sm:$0xf]
    %v527 = vld [vmem:[#allocation10 + $0x1c] sm:$0xf]
    %v528 = vld [vmem:[#allocation10 + $0x20] sm:$0xf]
    %v529 = vld [vmem:[#allocation10 + $0x24] sm:$0xf]
    %v530 = vld [vmem:[#allocation10 + $0x28] sm:$0xf]
    %v531 = vld [vmem:[#allocation10 + $0x2c] sm:$0xf]
    %v532 = vld [vmem:[#allocation10 + $0x30] sm:$0xf]
    %v533 = vld [vmem:[#allocation10 + $0x34] sm:$0xf]
    %v534 = vld [vmem:[#allocation10 + $0x38] sm:$0xf]
    %v535 = vld [vmem:[#allocation10 + $0x3c] sm:$0xf]
    %v536 = vld [vmem:[%s5] sm:$0x1]
    %v538 = vlaneseq
    %v539 = vshrl.u32 %v538, 7
    %v540 = vsub.s32 0, %v539
    %v541 = vrot.slane %v536, %v540
    %v559 = vunpack.c.l.b16 %v520
    %v560 = vunpack.c.l.b16 %v521
    %v561 = vunpack.c.l.b16 %v522
    %v562 = vunpack.c.l.b16 %v523
    %v563 = vunpack.c.l.b16 %v524
    %v564 = vunpack.c.l.b16 %v525
    %v565 = vunpack.c.l.b16 %v526
    %v566 = vunpack.c.l.b16 %v527
    %v567 = vunpack.c.l.b16 %v528
    %v568 = vunpack.c.l.b16 %v529
    %v569 = vunpack.c.l.b16 %v530
    %v570 = vunpack.c.l.b16 %v531
    %v571 = vunpack.c.l.b16 %v532
    %v572 = vunpack.c.l.b16 %v533
    %v573 = vunpack.c.l.b16 %v534
    %v574 = vunpack.c.l.b16 %v535
    %v575 = vpack.c.b16 %v560, %v559
    %v576 = vpack.c.b16 %v562, %v561
    %v577 = vpack.c.b16 %v564, %v563
    %v578 = vpack.c.b16 %v566, %v565
    %v579 = vpack.c.b16 %v568, %v567
    %v580 = vpack.c.b16 %v570, %v569
    %v581 = vpack.c.b16 %v572, %v571
    %v582 = vpack.c.b16 %v574, %v573
    %591 = vmatprep.subr.bf16.mxu0 0
    %592 = vmatpush1.bf16.msra.mxu0 %v575
    %593 = vmatprep.subr.bf16.mxu0 0
    %594 = vmatpush1.bf16.msra.mxu0 %v576
    %595 = vmatprep.subr.bf16.mxu0 0
    %596 = vmatpush1.bf16.msra.mxu0 %v577
    %597 = vmatprep.subr.bf16.mxu0 0
    %598 = vmatpush1.bf16.msra.mxu0 %v578
    %599 = vmatprep.subr.bf16.mxu0 0
    %600 = vmatpush1.bf16.msra.mxu0 %v579
    %601 = vmatprep.subr.bf16.mxu0 0
    %602 = vmatpush1.bf16.msra.mxu0 %v580
    %603 = vmatprep.subr.bf16.mxu0 0
    %604 = vmatpush1.bf16.msra.mxu0 %v581
    %605 = vmatprep.subr.bf16.mxu0 0
    %606 = vmatpush1.bf16.msra.mxu0 %v582
    %607 = vmatprep.subr.bf16.mxu0 0
    %608 = vmatpush1.bf16.msra.mxu0 0
    %609 = vmatprep.subr.bf16.mxu0 0
    %610 = vmatpush1.bf16.msra.mxu0 0
    %611 = vmatprep.subr.bf16.mxu0 0
    %612 = vmatpush1.bf16.msra.mxu0 0
    %613 = vmatprep.subr.bf16.mxu0 0
    %614 = vmatpush1.bf16.msra.mxu0 0
    %615 = vmatprep.subr.bf16.mxu0 0
    %616 = vmatpush1.bf16.msra.mxu0 0
    %617 = vmatprep.subr.bf16.mxu0 0
    %618 = vmatpush1.bf16.msra.mxu0 0
    %619 = vmatprep.subr.bf16.mxu0 0
    %620 = vmatpush1.bf16.msra.mxu0 0
    %621 = vmatprep.subr.bf16.mxu0 0
    %622 = vmatpush1.bf16.msra.mxu0 0
    %623 = vmatprep.mubr.bf16.mxu0 0
    %624 = vmatmul.mubr.bf16.gmra.mrb[0].mxu0 %v519
    %v625 = vpop.f32.mrb[0].mxu0
    %v626 = vadd.f32 %v541, %v625
    %v627 = vpop.f32.mrb[0].mxu0
    %v628 = vpop.f32.mrb[0].mxu0
    %v629 = vpop.f32.mrb[0].mxu0
    %630 = vdwg.mxu0
    %631 = vst [vmem:[#allocation13] sm:$0xff] %v626
    // Predicated region
    $region58: #{tpu_custom_call.1} parent=1 // pred_check
      _
    $region59: #{tpu_custom_call.1} parent=1 // pred_check_branch
      %633 = sbr.rel (0) target = $region61
    $region60: #{tpu_custom_call.1} parent=1 // pred_region
      %s635 = ssub.s32 128, 128
      %636 = vsyncadd [#allocation4], %s635
      %s638 = sshll.u32 [#allocation13], 4
      %s639 = int_to_ptr.vmem [resolvable:$true] %s638
      %641 = dma.vmem_to_hbm [thread:$0]  %s639, 128, %s8, [#allocation4]
    $region61: #{tpu_custom_call.1} parent=1 // pred_fallthru
      _
    // Predicated region
    $region62: #{tpu_custom_call.1} parent=1 // pred_check
      _
    $region63: #{tpu_custom_call.1} parent=1 // pred_check_branch
      %643 = sbr.rel (0) target = $region65
    $region64: #{tpu_custom_call.1} parent=1 // pred_region
      %644 = dma.done [#allocation4], 128
    $region65: #{tpu_custom_call.1} parent=1 // pred_fallthru
      _
    %645 = vsyncpa [#allocation3], 1
    %646 = vsyncpa [#allocation6], 1
    %647 = vsyncpa [#allocation9], 1
    %648 = vsyncpa [#allocation12], 1
    %649 = vsyncpa [#allocation4], 1

// kernel: tpu_custom_call.1
$region0: #{tpu_custom_call.1}
  #allocation0 [shape = 'u32[]', space=smem, size = 0x4, offset = 0x4, fixed_abs, tag = 'smem constant byte address 0x4 - core index']
  #allocation1 [shape = 'u32[144,128]{1,0:T(1,128)}', space=vmem, size = 0x12000, scoped, tag = 'internal scratch']
  %s0 = inlined_call_operand.hbm [shape: bf16[8,128], index: 0, kind: input, shape index: {}]
  %s1 = inlined_call_operand.hbm [shape: bf16[8,128], index: 1, kind: input, shape index: {}]
  %s2 = inlined_call_operand.hbm [shape: bf16[128,128], index: 2, kind: input, shape index: {}]
  %s3 = inlined_call_operand.hbm [shape: bf16[128,256], index: 3, kind: input, shape index: {}]
  %s4 = inlined_call_operand.hbm [shape: bf16[128,128], index: 4, kind: input, shape index: {}]
  %s5 = inlined_call_operand.vmem [shape: f32[1,128], index: 5, kind: input, shape index: {}]
  %s6 = inlined_call_operand.hbm [shape: bf16[128,128], index: 6, kind: input, shape index: {}]
  %s7 = inlined_call_operand.vmem [shape: f32[1,128], index: 7, kind: input, shape index: {}]
  %s8 = inlined_call_operand.hbm [shape: f32[8,128], index: 8, kind: output, shape index: {}]
  %s9 = sld [smem:[#allocation0]]
  $region66: #{tpu_custom_call.1} parent=0
    _
  %s11 = ssub.s32 1, %s9
  %s12 = scalar_select 0, %s11, %s9
  $region1: #{tpu_custom_call.1} parent=0
    #allocation2 [shape = 'u8[2048]{0}', space=vmem, size = 0x800, scoped, tag = 'input window, operand 0, single buffered']
    #allocation3 [shape = 's32[1]{0}', space=sflag, size = 0x4, scoped, tag = 'scoped memory for tpu_custom_call.1']
    #allocation4 [shape = 's32[1]{0}', space=sflag, size = 0x4, scoped, tag = 'scoped memory for tpu_custom_call.1']
    #allocation5 [shape = 'u8[2048]{0}', space=vmem, size = 0x800, scoped, tag = 'input window, operand 1, single buffered']
    #allocation6 [shape = 's32[1]{0}', space=sflag, size = 0x4, scoped, tag = 'scoped memory for tpu_custom_call.1']
    #allocation7 [shape = 'u8[32768]{0}', space=vmem, size = 0x8000, scoped, tag = 'input window, operand 2, single buffered']
    #allocation8 [shape = 'u8[65536]{0}', space=vmem, size = 0x10000, scoped, tag = 'input window, operand 3, single buffered']
    #allocation9 [shape = 's32[1]{0}', space=sflag, size = 0x4, scoped, tag = 'scoped memory for tpu_custom_call.1']
    #allocation10 [shape = 'u8[32768]{0}', space=vmem, size = 0x8000, scoped, tag = 'input window, operand 4, single buffered']
    #allocation11 [shape = 'u8[32768]{0}', space=vmem, size = 0x8000, scoped, tag = 'input window, operand 6, single buffered']
    #allocation12 [shape = 's32[1]{0}', space=sflag, size = 0x4, scoped, tag = 'scoped memory for tpu_custom_call.1']
    #allocation13 [shape = 'u8[4096]{0}', space=vmem, size = 0x1000, scoped, tag = 'output window, operand 0, single buffered']
    %13 = vsyncpa [#allocation3], 0
    %14 = vsyncpa [#allocation6], 0
    %15 = vsyncpa [#allocation9], 0
    %16 = vsyncpa [#allocation12], 0
    %17 = vsyncpa [#allocation4], 0
    // Predicated region
    $region2: #{tpu_custom_call.1} parent=1 // pred_check
      _
    $region3: #{tpu_custom_call.1} parent=1 // pred_check_branch
      %19 = sbr.rel (0) target = $region5
    $region4: #{tpu_custom_call.1} parent=1 // pred_region
      %s21 = ssub.s32 64, 64
      %22 = vsyncadd [#allocation3], %s21
      %s24 = sshll.u32 [#allocation2], 4
      %s25 = int_to_ptr.vmem [resolvable:$true] %s24
      %27 = dma.hbm_to_vmem [thread:$0]  %s0, 64, %s25, [#allocation3]
    $region5: #{tpu_custom_call.1} parent=1 // pred_fallthru
      _
    // Predicated region
    $region6: #{tpu_custom_call.1} parent=1 // pred_check
      _
    $region7: #{tpu_custom_call.1} parent=1 // pred_check_branch
      %29 = sbr.rel (0) target = $region9
    $region8: #{tpu_custom_call.1} parent=1 // pred_region
      %s31 = ssub.s32 64, 64
      %32 = vsyncadd [#allocation6], %s31
      %s34 = sshll.u32 [#allocation5], 4
      %s35 = int_to_ptr.vmem [resolvable:$true] %s34
      %37 = dma.hbm_to_vmem [thread:$0]  %s1, 64, %s35, [#allocation6]
    $region9: #{tpu_custom_call.1} parent=1 // pred_fallthru
      _
    // Predicated region
    $region10: #{tpu_custom_call.1} parent=1 // pred_check
      _
    $region11: #{tpu_custom_call.1} parent=1 // pred_check_branch
      %39 = sbr.rel (0) target = $region13
    $region12: #{tpu_custom_call.1} parent=1 // pred_region
      %s41 = ssub.s32 1024, 1024
      %42 = vsyncadd [#allocation6], %s41
      %s43 = sshll.u32 [#allocation7], 4
      %s44 = int_to_ptr.vmem [resolvable:$true] %s43
      %49 = dma.hbm_to_vmem [thread:$0]  %s2, 1024, %s44, [#allocation6], 64, 64, 4
    $region13: #{tpu_custom_call.1} parent=1 // pred_fallthru
      _
    // Predicated region
    $region14: #{tpu_custom_call.1} parent=1 // pred_check
      _
    $region15: #{tpu_custom_call.1} parent=1 // pred_check_branch
      %51 = sbr.rel (0) target = $region17
    $region16: #{tpu_custom_call.1} parent=1 // pred_region
      %s53 = ssub.s32 2048, 2048
      %54 = vsyncadd [#allocation9], %s53
      %s55 = sshll.u32 [#allocation8], 4
      %s56 = int_to_ptr.vmem [resolvable:$true] %s55
      %61 = dma.hbm_to_vmem [thread:$0]  %s3, 2048, %s56, [#allocation9], 128, 128, 8
    $region17: #{tpu_custom_call.1} parent=1 // pred_fallthru
      _
    // Predicated region
    $region18: #{tpu_custom_call.1} parent=1 // pred_check
      _
    $region19: #{tpu_custom_call.1} parent=1 // pred_check_branch
      %63 = sbr.rel (0) target = $region21
    $region20: #{tpu_custom_call.1} parent=1 // pred_region
      %s65 = ssub.s32 1024, 1024
      %66 = vsyncadd [#allocation9], %s65
      %s67 = sshll.u32 [#allocation10], 4
      %s68 = int_to_ptr.vmem [resolvable:$true] %s67
      %73 = dma.hbm_to_vmem [thread:$0]  %s4, 1024, %s68, [#allocation9], 64, 64, 4
    $region21: #{tpu_custom_call.1} parent=1 // pred_fallthru
      _
    // Predicated region
    $region22: #{tpu_custom_call.1} parent=1 // pred_check
      _
    $region23: #{tpu_custom_call.1} parent=1 // pred_check_branch
      %75 = sbr.rel (0) target = $region25
    $region24: #{tpu_custom_call.1} parent=1 // pred_region
      _
    $region25: #{tpu_custom_call.1} parent=1 // pred_fallthru
      _
    // Predicated region
    $region26: #{tpu_custom_call.1} parent=1 // pred_check
      _
    $region27: #{tpu_custom_call.1} parent=1 // pred_check_branch
      %77 = sbr.rel (0) target = $region29
    $region28: #{tpu_custom_call.1} parent=1 // pred_region
      %s79 = ssub.s32 1024, 1024
      %80 = vsyncadd [#allocation12], %s79
      %s81 = sshll.u32 [#allocation11], 4
      %s82 = int_to_ptr.vmem [resolvable:$true] %s81
      %87 = dma.hbm_to_vmem [thread:$0]  %s6, 1024, %s82, [#allocation12], 64, 64, 4
    $region29: #{tpu_custom_call.1} parent=1 // pred_fallthru
      _
    // Predicated region
    $region30: #{tpu_custom_call.1} parent=1 // pred_check
      _
    $region31: #{tpu_custom_call.1} parent=1 // pred_check_branch
      %89 = sbr.rel (0) target = $region33
    $region32: #{tpu_custom_call.1} parent=1 // pred_region
      _
    $region33: #{tpu_custom_call.1} parent=1 // pred_fallthru
      _
    // Predicated region
    $region34: #{tpu_custom_call.1} parent=1 // pred_check
      _
    $region35: #{tpu_custom_call.1} parent=1 // pred_check_branch
      %91 = sbr.rel (0) target = $region37
    $region36: #{tpu_custom_call.1} parent=1 // pred_region
      %92 = dma.done [#allocation3], 64
    $region37: #{tpu_custom_call.1} parent=1 // pred_fallthru
      _
    // Predicated region
    $region38: #{tpu_custom_call.1} parent=1 // pred_check
      _
    $region39: #{tpu_custom_call.1} parent=1 // pred_check_branch
      %94 = sbr.rel (0) target = $region41
    $region40: #{tpu_custom_call.1} parent=1 // pred_region
      %95 = dma.done [#allocation6], 64
    $region41: #{tpu_custom_call.1} parent=1 // pred_fallthru
      _
    // Predicated region
    $region42: #{tpu_custom_call.1} parent=1 // pred_check
      _
    $region43: #{tpu_custom_call.1} parent=1 // pred_check_branch
      %97 = sbr.rel (0) target = $region45
    $region44: #{tpu_custom_call.1} parent=1 // pred_region
      %98 = dma.done [#allocation6], 1024
    $region45: #{tpu_custom_call.1} parent=1 // pred_fallthru
      _
    // Predicated region
    $region46: #{tpu_custom_call.1} parent=1 // pred_check
      _
    $region47: #{tpu_custom_call.1} parent=1 // pred_check_branch
      %100 = sbr.rel (0) target = $region49
    $region48: #{tpu_custom_call.1} parent=1 // pred_region
      %101 = dma.done [#allocation9], 2048
    $region49: #{tpu_custom_call.1} parent=1 // pred_fallthru
      _
    // Predicated region
    $region50: #{tpu_custom_call.1} parent=1 // pred_check
      _
    $region51: #{tpu_custom_call.1} parent=1 // pred_check_branch
      %103 = sbr.rel (0) target = $region53
    $region52: #{tpu_custom_call.1} parent=1 // pred_region
      %104 = dma.done [#allocation9], 1024
    $region53: #{tpu_custom_call.1} parent=1 // pred_fallthru
      _
    // Predicated region
    $region54: #{tpu_custom_call.1} parent=1 // pred_check
      _
    $region55: #{tpu_custom_call.1} parent=1 // pred_check_branch
      %106 = sbr.rel (0) target = $region57
    $region56: #{tpu_custom_call.1} parent=1 // pred_region
      %107 = dma.done [#allocation12], 1024
    $region57: #{tpu_custom_call.1} parent=1 // pred_fallthru
      _
    %v109 = vld [vmem:[#allocation2] sm:$0xf]
    %v110 = vld [vmem:[#allocation5] sm:$0xf]
    %v111 = vld [vmem:[#allocation7] sm:$0xf]
    %v112 = vld [vmem:[#allocation7 + $0x4] sm:$0xf]
    %v113 = vld [vmem:[#allocation7 + $0x8] sm:$0xf]
    %v114 = vld [vmem:[#allocation7 + $0xc] sm:$0xf]
    %v115 = vld [vmem:[#allocation7 + $0x10] sm:$0xf]
    %v116 = vld [vmem:[#allocation7 + $0x14] sm:$0xf]
    %v117 = vld [vmem:[#allocation7 + $0x18] sm:$0xf]
    %v118 = vld [vmem:[#allocation7 + $0x1c] sm:$0xf]
    %v119 = vld [vmem:[#allocation7 + $0x20] sm:$0xf]
    %v120 = vld [vmem:[#allocation7 + $0x24] sm:$0xf]
    %v121 = vld [vmem:[#allocation7 + $0x28] sm:$0xf]
    %v122 = vld [vmem:[#allocation7 + $0x2c] sm:$0xf]
    %v123 = vld [vmem:[#allocation7 + $0x30] sm:$0xf]
    %v124 = vld [vmem:[#allocation7 + $0x34] sm:$0xf]
    %v125 = vld [vmem:[#allocation7 + $0x38] sm:$0xf]
    %v126 = vld [vmem:[#allocation7 + $0x3c] sm:$0xf]
    %v143 = vunpack.c.l.b16 %v111
    %v144 = vunpack.c.l.b16 %v112
    %v145 = vunpack.c.l.b16 %v113
    %v146 = vunpack.c.l.b16 %v114
    %v147 = vunpack.c.l.b16 %v115
    %v148 = vunpack.c.l.b16 %v116
    %v149 = vunpack.c.l.b16 %v117
    %v150 = vunpack.c.l.b16 %v118
    %v151 = vunpack.c.l.b16 %v119
    %v152 = vunpack.c.l.b16 %v120
    %v153 = vunpack.c.l.b16 %v121
    %v154 = vunpack.c.l.b16 %v122
    %v155 = vunpack.c.l.b16 %v123
    %v156 = vunpack.c.l.b16 %v124
    %v157 = vunpack.c.l.b16 %v125
    %v158 = vunpack.c.l.b16 %v126
    %v159 = vpack.c.b16 %v144, %v143
    %v160 = vpack.c.b16 %v146, %v145
    %v161 = vpack.c.b16 %v148, %v147
    %v162 = vpack.c.b16 %v150, %v149
    %v163 = vpack.c.b16 %v152, %v151
    %v164 = vpack.c.b16 %v154, %v153
    %v165 = vpack.c.b16 %v156, %v155
    %v166 = vpack.c.b16 %v158, %v157
    %175 = vmatprep.subr.bf16.mxu0 0
    %176 = vmatpush1.bf16.msra.mxu0 %v159
    %177 = vmatprep.subr.bf16.mxu0 0
    %178 = vmatpush1.bf16.msra.mxu0 %v160
    %179 = vmatprep.subr.bf16.mxu0 0
    %180 = vmatpush1.bf16.msra.mxu0 %v161
    %181 = vmatprep.subr.bf16.mxu0 0
    %182 = vmatpush1.bf16.msra.mxu0 %v162
    %183 = vmatprep.subr.bf16.mxu0 0
    %184 = vmatpush1.bf16.msra.mxu0 %v163
    %185 = vmatprep.subr.bf16.mxu0 0
    %186 = vmatpush1.bf16.msra.mxu0 %v164
    %187 = vmatprep.subr.bf16.mxu0 0
    %188 = vmatpush1.bf16.msra.mxu0 %v165
    %189 = vmatprep.subr.bf16.mxu0 0
    %190 = vmatpush1.bf16.msra.mxu0 %v166
    %191 = vmatprep.subr.bf16.mxu0 0
    %192 = vmatpush1.bf16.msra.mxu0 0
    %193 = vmatprep.subr.bf16.mxu0 0
    %194 = vmatpush1.bf16.msra.mxu0 0
    %195 = vmatprep.subr.bf16.mxu0 0
    %196 = vmatpush1.bf16.msra.mxu0 0
    %197 = vmatprep.subr.bf16.mxu0 0
    %198 = vmatpush1.bf16.msra.mxu0 0
    %199 = vmatprep.subr.bf16.mxu0 0
    %200 = vmatpush1.bf16.msra.mxu0 0
    %201 = vmatprep.subr.bf16.mxu0 0
    %202 = vmatpush1.bf16.msra.mxu0 0
    %203 = vmatprep.subr.bf16.mxu0 0
    %204 = vmatpush1.bf16.msra.mxu0 0
    %205 = vmatprep.subr.bf16.mxu0 0
    %206 = vmatpush1.bf16.msra.mxu0 0
    %207 = vmatprep.mubr.bf16.mxu0 0
    %208 = vmatmul.mubr.bf16.gmra.mrb[0].mxu0 %v109
    %v209 = vpop.f32.mrb[0].mxu0
    %v210 = vadd.f32 0.0, %v209
    %v211 = vpop.f32.mrb[0].mxu0
    %v212 = vpop.f32.mrb[0].mxu0
    %v213 = vpop.f32.mrb[0].mxu0
    %214 = vdwg.mxu0
    %v215 = vld [vmem:[#allocation8] sm:$0xff]
    %v216 = vld [vmem:[#allocation8 + $0x8] sm:$0xff]
    %v217 = vld [vmem:[#allocation8 + $0x10] sm:$0xff]
    %v218 = vld [vmem:[#allocation8 + $0x18] sm:$0xff]
    %v219 = vld [vmem:[#allocation8 + $0x20] sm:$0xff]
    %v220 = vld [vmem:[#allocation8 + $0x28] sm:$0xff]
    %v221 = vld [vmem:[#allocation8 + $0x30] sm:$0xff]
    %v222 = vld [vmem:[#allocation8 + $0x38] sm:$0xff]
    %v223 = vld [vmem:[#allocation8 + $0x40] sm:$0xff]
    %v224 = vld [vmem:[#allocation8 + $0x48] sm:$0xff]
    %v225 = vld [vmem:[#allocation8 + $0x50] sm:$0xff]
    %v226 = vld [vmem:[#allocation8 + $0x58] sm:$0xff]
    %v227 = vld [vmem:[#allocation8 + $0x60] sm:$0xff]
    %v228 = vld [vmem:[#allocation8 + $0x68] sm:$0xff]
    %v229 = vld [vmem:[#allocation8 + $0x70] sm:$0xff]
    %v230 = vld [vmem:[#allocation8 + $0x78] sm:$0xff]
    %v247 = vunpack.c.l.b16 %v215
    %v248 = vunpack.c.h.b16 %v215
    %v249 = vunpack.c.l.b16 %v216
    %v250 = vunpack.c.h.b16 %v216
    %v251 = vunpack.c.l.b16 %v217
    %v252 = vunpack.c.h.b16 %v217
    %v253 = vunpack.c.l.b16 %v218
    %v254 = vunpack.c.h.b16 %v218
    %v255 = vunpack.c.l.b16 %v219
    %v256 = vunpack.c.h.b16 %v219
    %v257 = vunpack.c.l.b16 %v220
    %v258 = vunpack.c.h.b16 %v220
    %v259 = vunpack.c.l.b16 %v221
    %v260 = vunpack.c.h.b16 %v221
    %v261 = vunpack.c.l.b16 %v222
    %v262 = vunpack.c.h.b16 %v222
    %v263 = vunpack.c.l.b16 %v223
    %v264 = vunpack.c.h.b16 %v223
    %v265 = vunpack.c.l.b16 %v224
    %v266 = vunpack.c.h.b16 %v224
    %v267 = vunpack.c.l.b16 %v225
    %v268 = vunpack.c.h.b16 %v225
    %v269 = vunpack.c.l.b16 %v226
    %v270 = vunpack.c.h.b16 %v226
    %v271 = vunpack.c.l.b16 %v227
    %v272 = vunpack.c.h.b16 %v227
    %v273 = vunpack.c.l.b16 %v228
    %v274 = vunpack.c.h.b16 %v228
    %v275 = vunpack.c.l.b16 %v229
    %v276 = vunpack.c.h.b16 %v229
    %v277 = vunpack.c.l.b16 %v230
    %v278 = vunpack.c.h.b16 %v230
    %v279 = vpack.c.b16 %v249, %v247
    %v280 = vpack.c.b16 %v250, %v248
    %v281 = vpack.c.b16 %v253, %v251
    %v282 = vpack.c.b16 %v254, %v252
    %v283 = vpack.c.b16 %v257, %v255
    %v284 = vpack.c.b16 %v258, %v256
    %v285 = vpack.c.b16 %v261, %v259
    %v286 = vpack.c.b16 %v262, %v260
    %v287 = vpack.c.b16 %v265, %v263
    %v288 = vpack.c.b16 %v266, %v264
    %v289 = vpack.c.b16 %v269, %v267
    %v290 = vpack.c.b16 %v270, %v268
    %v291 = vpack.c.b16 %v273, %v271
    %v292 = vpack.c.b16 %v274, %v272
    %v293 = vpack.c.b16 %v277, %v275
    %v294 = vpack.c.b16 %v278, %v276
    %311 = vmatprep.subr.bf16.mxu0 %v280
    %312 = vmatpush1.bf16.msra.mxu0 %v279
    %313 = vmatprep.subr.bf16.mxu0 %v282
    %314 = vmatpush1.bf16.msra.mxu0 %v281
    %315 = vmatprep.subr.bf16.mxu0 %v284
    %316 = vmatpush1.bf16.msra.mxu0 %v283
    %317 = vmatprep.subr.bf16.mxu0 %v286
    %318 = vmatpush1.bf16.msra.mxu0 %v285
    %319 = vmatprep.subr.bf16.mxu0 %v288
    %320 = vmatpush1.bf16.msra.mxu0 %v287
    %321 = vmatprep.subr.bf16.mxu0 %v290
    %322 = vmatpush1.bf16.msra.mxu0 %v289
    %323 = vmatprep.subr.bf16.mxu0 %v292
    %324 = vmatpush1.bf16.msra.mxu0 %v291
    %325 = vmatprep.subr.bf16.mxu0 %v294
    %326 = vmatpush1.bf16.msra.mxu0 %v293
    %327 = vmatprep.subr.bf16.mxu0 0
    %328 = vmatpush1.bf16.msra.mxu0 0
    %329 = vmatprep.subr.bf16.mxu0 0
    %330 = vmatpush1.bf16.msra.mxu0 0
    %331 = vmatprep.subr.bf16.mxu0 0
    %332 = vmatpush1.bf16.msra.mxu0 0
    %333 = vmatprep.subr.bf16.mxu0 0
    %334 = vmatpush1.bf16.msra.mxu0 0
    %335 = vmatprep.subr.bf16.mxu0 0
    %336 = vmatpush1.bf16.msra.mxu0 0
    %337 = vmatprep.subr.bf16.mxu0 0
    %338 = vmatpush1.bf16.msra.mxu0 0
    %339 = vmatprep.subr.bf16.mxu0 0
    %340 = vmatpush1.bf16.msra.mxu0 0
    %341 = vmatprep.subr.bf16.mxu0 0
    %342 = vmatpush1.bf16.msra.mxu0 0
    %343 = vmatprep.mubr.bf16.mxu0 0
    %344 = vmatmul.mubr.bf16.gmra.mrb[0].mxu0 %v110
    %v345 = vpop.f32.mrb[0].mxu0
    %v346 = vadd.f32 0.0, %v345
    %v347 = vpop.f32.mrb[0].mxu0
    %v348 = vadd.f32 0.0, %v347
    %v349 = vpop.f32.mrb[0].mxu0
    %v350 = vpop.f32.mrb[0].mxu0
    %351 = vdwg.mxu0
    %v352 = vmul.f32 %v210, %v346
    %v353 = vpack.c.bf16 %v352, %v352
    %v354 = vld [vmem:[#allocation11] sm:$0xf]
    %v355 = vld [vmem:[#allocation11 + $0x4] sm:$0xf]
    %v356 = vld [vmem:[#allocation11 + $0x8] sm:$0xf]
    %v357 = vld [vmem:[#allocation11 + $0xc] sm:$0xf]
    %v358 = vld [vmem:[#allocation11 + $0x10] sm:$0xf]
    %v359 = vld [vmem:[#allocation11 + $0x14] sm:$0xf]
    %v360 = vld [vmem:[#allocation11 + $0x18] sm:$0xf]
    %v361 = vld [vmem:[#allocation11 + $0x1c] sm:$0xf]
    %v362 = vld [vmem:[#allocation11 + $0x20] sm:$0xf]
    %v363 = vld [vmem:[#allocation11 + $0x24] sm:$0xf]
    %v364 = vld [vmem:[#allocation11 + $0x28] sm:$0xf]
    %v365 = vld [vmem:[#allocation11 + $0x2c] sm:$0xf]
    %v366 = vld [vmem:[#allocation11 + $0x30] sm:$0xf]
    %v367 = vld [vmem:[#allocation11 + $0x34] sm:$0xf]
    %v368 = vld [vmem:[#allocation11 + $0x38] sm:$0xf]
    %v369 = vld [vmem:[#allocation11 + $0x3c] sm:$0xf]
    %v386 = vunpack.c.l.b16 %v354
    %v387 = vunpack.c.l.b16 %v355
    %v388 = vunpack.c.l.b16 %v356
    %v389 = vunpack.c.l.b16 %v357
    %v390 = vunpack.c.l.b16 %v358
    %v391 = vunpack.c.l.b16 %v359
    %v392 = vunpack.c.l.b16 %v360
    %v393 = vunpack.c.l.b16 %v361
    %v394 = vunpack.c.l.b16 %v362
    %v395 = vunpack.c.l.b16 %v363
    %v396 = vunpack.c.l.b16 %v364
    %v397 = vunpack.c.l.b16 %v365
    %v398 = vunpack.c.l.b16 %v366
    %v399 = vunpack.c.l.b16 %v367
    %v400 = vunpack.c.l.b16 %v368
    %v401 = vunpack.c.l.b16 %v369
    %v402 = vpack.c.b16 %v387, %v386
    %v403 = vpack.c.b16 %v389, %v388
    %v404 = vpack.c.b16 %v391, %v390
    %v405 = vpack.c.b16 %v393, %v392
    %v406 = vpack.c.b16 %v395, %v394
    %v407 = vpack.c.b16 %v397, %v396
    %v408 = vpack.c.b16 %v399, %v398
    %v409 = vpack.c.b16 %v401, %v400
    %418 = vmatprep.subr.bf16.mxu0 0
    %419 = vmatpush1.bf16.msra.mxu0 %v402
    %420 = vmatprep.subr.bf16.mxu0 0
    %421 = vmatpush1.bf16.msra.mxu0 %v403
    %422 = vmatprep.subr.bf16.mxu0 0
    %423 = vmatpush1.bf16.msra.mxu0 %v404
    %424 = vmatprep.subr.bf16.mxu0 0
    %425 = vmatpush1.bf16.msra.mxu0 %v405
    %426 = vmatprep.subr.bf16.mxu0 0
    %427 = vmatpush1.bf16.msra.mxu0 %v406
    %428 = vmatprep.subr.bf16.mxu0 0
    %429 = vmatpush1.bf16.msra.mxu0 %v407
    %430 = vmatprep.subr.bf16.mxu0 0
    %431 = vmatpush1.bf16.msra.mxu0 %v408
    %432 = vmatprep.subr.bf16.mxu0 0
    %433 = vmatpush1.bf16.msra.mxu0 %v409
    %434 = vmatprep.subr.bf16.mxu0 0
    %435 = vmatpush1.bf16.msra.mxu0 0
    %436 = vmatprep.subr.bf16.mxu0 0
    %437 = vmatpush1.bf16.msra.mxu0 0
    %438 = vmatprep.subr.bf16.mxu0 0
    %439 = vmatpush1.bf16.msra.mxu0 0
    %440 = vmatprep.subr.bf16.mxu0 0
    %441 = vmatpush1.bf16.msra.mxu0 0
    %442 = vmatprep.subr.bf16.mxu0 0
    %443 = vmatpush1.bf16.msra.mxu0 0
    %444 = vmatprep.subr.bf16.mxu0 0
    %445 = vmatpush1.bf16.msra.mxu0 0
    %446 = vmatprep.subr.bf16.mxu0 0
    %447 = vmatpush1.bf16.msra.mxu0 0
    %448 = vmatprep.subr.bf16.mxu0 0
    %449 = vmatpush1.bf16.msra.mxu0 0
    %450 = vmatprep.mubr.bf16.mxu0 0
    %451 = vmatmul.mubr.bf16.gmra.mrb[0].mxu0 %v353
    %v452 = vpop.f32.mrb[0].mxu0
    %v453 = vadd.f32 0.0, %v452
    %v454 = vpop.f32.mrb[0].mxu0
    %v455 = vpop.f32.mrb[0].mxu0
    %v456 = vpop.f32.mrb[0].mxu0
    %457 = vdwg.mxu0
    %v458 = vmul.f32 %v453, 0.125
    %v459 = vld [vmem:[%s7] sm:$0x1]
    %v461 = vlaneseq
    %v462 = vshrl.u32 %v461, 7
    %v463 = vsub.s32 0, %v462
    %v464 = vrot.slane %v459, %v463
    %v466 = vadd.f32 %v458, %v464
    %467 = vmax.xlane.f32.xlu0 %v466
    %v468 = vpop.xlane.xlu0 %467
    %v469 = vsub.f32 %v466, %v468
    %v470 = vmul.f32 %v469, 1.442695
    %v471 = vpow.pop %v470
    %472 = vadd.xlane.f32.xlu0 %v471
    %v473 = vpop.xlane.xlu0 %472
    %v474 = vrcp.pop %v473
    %v475 = vmul.f32 %v471, %v474
    %v476 = vpack.c.bf16 %v475, %v475
    %477 = vmatprep.subr.bf16.mxu0 0
    %478 = vmatpush1.bf16.xpose.msra.mxu0 %v402
    %479 = vmatprep.subr.bf16.mxu0 0
    %480 = vmatpush1.bf16.xpose.msra.mxu0 %v403
    %481 = vmatprep.subr.bf16.mxu0 0
    %482 = vmatpush1.bf16.xpose.msra.mxu0 %v404
    %483 = vmatprep.subr.bf16.mxu0 0
    %484 = vmatpush1.bf16.xpose.msra.mxu0 %v405
    %485 = vmatprep.subr.bf16.mxu0 0
    %486 = vmatpush1.bf16.xpose.msra.mxu0 %v406
    %487 = vmatprep.subr.bf16.mxu0 0
    %488 = vmatpush1.bf16.xpose.msra.mxu0 %v407
    %489 = vmatprep.subr.bf16.mxu0 0
    %490 = vmatpush1.bf16.xpose.msra.mxu0 %v408
    %491 = vmatprep.subr.bf16.mxu0 0
    %492 = vmatpush1.bf16.xpose.msra.mxu0 %v409
    %493 = vmatprep.subr.bf16.mxu0 0
    %494 = vmatpush1.bf16.xpose.msra.mxu0 0
    %495 = vmatprep.subr.bf16.mxu0 0
    %496 = vmatpush1.bf16.xpose.msra.mxu0 0
    %497 = vmatprep.subr.bf16.mxu0 0
    %498 = vmatpush1.bf16.xpose.msra.mxu0 0
    %499 = vmatprep.subr.bf16.mxu0 0
    %500 = vmatpush1.bf16.xpose.msra.mxu0 0
    %501 = vmatprep.subr.bf16.mxu0 0
    %502 = vmatpush1.bf16.xpose.msra.mxu0 0
    %503 = vmatprep.subr.bf16.mxu0 0
    %504 = vmatpush1.bf16.xpose.msra.mxu0 0
    %505 = vmatprep.subr.bf16.mxu0 0
    %506 = vmatpush1.bf16.xpose.msra.mxu0 0
    %507 = vmatprep.subr.bf16.mxu0 0
    %508 = vmatpush1.bf16.xpose.msra.mxu0 0
    %509 = vmatprep.mubr.bf16.mxu0 0
    %510 = vmatmul.mubr.bf16.gmra.mrb[0].mxu0 %v476
    %v511 = vpop.f32.mrb[0].mxu0
    %v512 = vadd.f32 0.0, %v511
    %v513 = vpop.f32.mrb[0].mxu0
    %v514 = vpop.f32.mrb[0].mxu0
    %v515 = vpop.f32.mrb[0].mxu0
    %516 = vdwg.mxu0
    %v517 = vpack.c.bf16 %v512, %v512
    %v518 = vpack.c.bf16 %v348, %v348
    %v519 = vmul.bf16 %v517, %v518
    %v520 = vld [vmem:[#allocation10] sm:$0xf]
    %v521 = vld [vmem:[#allocation10 + $0x4] sm:$0xf]
    %v522 = vld [vmem:[#allocation10 + $0x8] sm:$0xf]
    %v523 = vld [vmem:[#allocation10 + $0xc] sm:$0xf]
    %v524 = vld [vmem:[#allocation10 + $0x10] sm:$0xf]
    %v525 = vld [vmem:[#allocation10 + $0x14] sm:$0xf]
    %v526 = vld [vmem:[#allocation10 + $0x18] sm:$0xf]
    %v527 = vld [vmem:[#allocation10 + $0x1c] sm:$0xf]
    %v528 = vld [vmem:[#allocation10 + $0x20] sm:$0xf]
    %v529 = vld [vmem:[#allocation10 + $0x24] sm:$0xf]
    %v530 = vld [vmem:[#allocation10 + $0x28] sm:$0xf]
    %v531 = vld [vmem:[#allocation10 + $0x2c] sm:$0xf]
    %v532 = vld [vmem:[#allocation10 + $0x30] sm:$0xf]
    %v533 = vld [vmem:[#allocation10 + $0x34] sm:$0xf]
    %v534 = vld [vmem:[#allocation10 + $0x38] sm:$0xf]
    %v535 = vld [vmem:[#allocation10 + $0x3c] sm:$0xf]
    %v536 = vld [vmem:[%s5] sm:$0x1]
    %v538 = vlaneseq
    %v539 = vshrl.u32 %v538, 7
    %v540 = vsub.s32 0, %v539
    %v541 = vrot.slane %v536, %v540
    %v559 = vunpack.c.l.b16 %v520
    %v560 = vunpack.c.l.b16 %v521
    %v561 = vunpack.c.l.b16 %v522
    %v562 = vunpack.c.l.b16 %v523
    %v563 = vunpack.c.l.b16 %v524
    %v564 = vunpack.c.l.b16 %v525
    %v565 = vunpack.c.l.b16 %v526
    %v566 = vunpack.c.l.b16 %v527
    %v567 = vunpack.c.l.b16 %v528
    %v568 = vunpack.c.l.b16 %v529
    %v569 = vunpack.c.l.b16 %v530
    %v570 = vunpack.c.l.b16 %v531
    %v571 = vunpack.c.l.b16 %v532
    %v572 = vunpack.c.l.b16 %v533
    %v573 = vunpack.c.l.b16 %v534
    %v574 = vunpack.c.l.b16 %v535
    %v575 = vpack.c.b16 %v560, %v559
    %v576 = vpack.c.b16 %v562, %v561
    %v577 = vpack.c.b16 %v564, %v563
    %v578 = vpack.c.b16 %v566, %v565
    %v579 = vpack.c.b16 %v568, %v567
    %v580 = vpack.c.b16 %v570, %v569
    %v581 = vpack.c.b16 %v572, %v571
    %v582 = vpack.c.b16 %v574, %v573
    %591 = vmatprep.subr.bf16.mxu0 0
    %592 = vmatpush1.bf16.msra.mxu0 %v575
    %593 = vmatprep.subr.bf16.mxu0 0
    %594 = vmatpush1.bf16.msra.mxu0 %v576
    %595 = vmatprep.subr.bf16.mxu0 0
    %596 = vmatpush1.bf16.msra.mxu0 %v577
    %597 = vmatprep.subr.bf16.mxu0 0
    %598 = vmatpush1.bf16.msra.mxu0 %v578
    %599 = vmatprep.subr.bf16.mxu0 0
    %600 = vmatpush1.bf16.msra.mxu0 %v579
    %601 = vmatprep.subr.bf16.mxu0 0
    %602 = vmatpush1.bf16.msra.mxu0 %v580
    %603 = vmatprep.subr.bf16.mxu0 0
    %604 = vmatpush1.bf16.msra.mxu0 %v581
    %605 = vmatprep.subr.bf16.mxu0 0
    %606 = vmatpush1.bf16.msra.mxu0 %v582
    %607 = vmatprep.subr.bf16.mxu0 0
    %608 = vmatpush1.bf16.msra.mxu0 0
    %609 = vmatprep.subr.bf16.mxu0 0
    %610 = vmatpush1.bf16.msra.mxu0 0
    %611 = vmatprep.subr.bf16.mxu0 0
    %612 = vmatpush1.bf16.msra.mxu0 0
    %613 = vmatprep.subr.bf16.mxu0 0
    %614 = vmatpush1.bf16.msra.mxu0 0
    %615 = vmatprep.subr.bf16.mxu0 0
    %616 = vmatpush1.bf16.msra.mxu0 0
    %617 = vmatprep.subr.bf16.mxu0 0
    %618 = vmatpush1.bf16.msra.mxu0 0
    %619 = vmatprep.subr.bf16.mxu0 0
    %620 = vmatpush1.bf16.msra.mxu0 0
    %621 = vmatprep.subr.bf16.mxu0 0
    %622 = vmatpush1.bf16.msra.mxu0 0
    %623 = vmatprep.mubr.bf16.mxu0 0
    %624 = vmatmul.mubr.bf16.gmra.mrb[0].mxu0 %v519
    %v625 = vpop.f32.mrb[0].mxu0
    %v626 = vadd.f32 %v541, %v625
    %v627 = vpop.f32.mrb[0].mxu0
    %v628 = vpop.f32.mrb[0].mxu0
    %v629 = vpop.f32.mrb[0].mxu0
    %630 = vdwg.mxu0
    %631 = vst [vmem:[#allocation13] sm:$0xff] %v626
    // Predicated region
    $region58: #{tpu_custom_call.1} parent=1 // pred_check
      _
    $region59: #{tpu_custom_call.1} parent=1 // pred_check_branch
      %633 = sbr.rel (0) target = $region61
    $region60: #{tpu_custom_call.1} parent=1 // pred_region
      %s635 = ssub.s32 128, 128
      %636 = vsyncadd [#allocation4], %s635
      %s638 = sshll.u32 [#allocation13], 4
      %s639 = int_to_ptr.vmem [resolvable:$true] %s638
      %641 = dma.vmem_to_hbm [thread:$0]  %s639, 128, %s8, [#allocation4]
    $region61: #{tpu_custom_call.1} parent=1 // pred_fallthru
      _
    // Predicated region
    $region62: #{tpu_custom_call.1} parent=1 // pred_check
      _
    $region63: #{tpu_custom_call.1} parent=1 // pred_check_branch
      %643 = sbr.rel (0) target = $region65
    $region64: #{tpu_custom_call.1} parent=1 // pred_region
      %644 = dma.done [#allocation4], 128
    $region65: #{tpu_custom_call.1} parent=1 // pred_fallthru
      _
    %645 = vsyncpa [#allocation3], 1
    %646 = vsyncpa [#allocation6], 1
    %647 = vsyncpa [#allocation9], 1
    %648 = vsyncpa [#allocation12], 1
    %649 = vsyncpa [#allocation4], 1

</llo_original>
